<compile_context>
chip_gen: v6e
topology: v6e:2x2x1
jax: 0.10.0
libtpu: 0.0.40
codegen_flags: <defaults>
</compile_context>

<pallas_src>
import jax
import jax.numpy as jnp
from jax.experimental import pallas as pl
from jax.experimental.pallas import tpu as pltpu


HIDDEN = 256
FUSED = 2 * HIDDEN      # Q1 and Q2 hidden activations stacked along lanes
OUT_PAD = 128           # lane-dense output slab; col 0 = q1, col 1 = q2


def _critic_kernel(s_ref, a_ref,
                   w1s_ref, w1a_ref, b1_ref,
                   w2_ref, b2_ref,
                   w3_ref, b3_ref,
                   out_ref):
  s = s_ref[...].astype(jnp.bfloat16)
  a = a_ref[...].astype(jnp.bfloat16)

  # Fused layer 1 (both heads at once): (bt, 512), f32 accumulation.
  h = (jnp.dot(s, w1s_ref[...], preferred_element_type=jnp.float32)
       + jnp.dot(a, w1a_ref[...], preferred_element_type=jnp.float32)
       + b1_ref[...])
  h = jnp.maximum(h, 0.0)

  # Fused layer 2: block-diagonal (512, 512) weight keeps the two heads separate.
  h = jnp.dot(h.astype(jnp.bfloat16), w2_ref[...],
              preferred_element_type=jnp.float32) + b2_ref[...]
  h = jnp.maximum(h, 0.0)

  # Fused layer 3: (512, 128) weight; lanes 0/1 carry q1/q2, the rest are zero pad.
  out = jnp.dot(h.astype(jnp.bfloat16), w3_ref[...],
                preferred_element_type=jnp.float32) + b3_ref[...]
  out_ref[...] = out.astype(out_ref.dtype)


def init_critic_params(key, state_dim, action_dim):
  """PyTorch-style nn.Linear init; weights stored as (in, out) == W.T."""
  in_dim = state_dim + action_dim
  dims = [(in_dim, HIDDEN), (HIDDEN, HIDDEN), (HIDDEN, 1),
          (in_dim, HIDDEN), (HIDDEN, HIDDEN), (HIDDEN, 1)]
  params = []
  keys = jax.random.split(key, 2 * len(dims))
  for i, (fan_in, fan_out) in enumerate(dims):
    bound = 1.0 / jnp.sqrt(float(fan_in))
    w = jax.random.uniform(keys[2 * i], (fan_in, fan_out), jnp.float32,
                           minval=-bound, maxval=bound)
    b = jax.random.uniform(keys[2 * i + 1], (1, fan_out), jnp.float32,
                           minval=-bound, maxval=bound)
    params.append((w, b))
  return params


def pack_critic_params(params, state_dim, action_dim):
  """One-time packing of the 6 PyTorch Linear layers into 3 fused bf16 weights."""
  (w1, b1), (w2, b2), (w3, b3), (w4, b4), (w5, b5), (w6, b6) = params

  w1_full = jnp.concatenate([w1, w4], axis=1)          # (in_dim, 512)
  w1s = w1_full[:state_dim]                            # (state_dim, 512)
  w1a = w1_full[state_dim:]                            # (action_dim, 512)
  b1p = jnp.concatenate([b1, b4], axis=1)              # (1, 512)

  w2_blk = jnp.zeros((FUSED, FUSED), jnp.float32)
  w2_blk = w2_blk.at[:HIDDEN, :HIDDEN].set(w2)
  w2_blk = w2_blk.at[HIDDEN:, HIDDEN:].set(w5)
  b2p = jnp.concatenate([b2, b5], axis=1)              # (1, 512)

  w3_pack = jnp.zeros((FUSED, OUT_PAD), jnp.float32)
  w3_pack = w3_pack.at[:HIDDEN, 0].set(w3[:, 0])
  w3_pack = w3_pack.at[HIDDEN:, 1].set(w6[:, 0])
  b3p = jnp.zeros((1, OUT_PAD), jnp.float32)
  b3p = b3p.at[0, 0].set(b3[0, 0])
  b3p = b3p.at[0, 1].set(b6[0, 0])

  # bf16 weights halve HBM->VMEM traffic; biases stay f32 (tiny, added in f32).
  return dict(
      w1s=w1s.astype(jnp.bfloat16), w1a=w1a.astype(jnp.bfloat16), b1=b1p,
      w2=w2_blk.astype(jnp.bfloat16), b2=b2p,
      w3=w3_pack.astype(jnp.bfloat16), b3=b3p)


def _batch_tile(B):
  bt = min(B, 512)
  return max(8, -(-bt // 8) * 8)   # multiple of 8 (sublane granularity)


@jax.jit
def critic_forward(state, action, packed):
  """Returns (q1, q2), each (B, 1) float32 — matches Critic.forward."""
  state = state.astype(jnp.float32)
  action = action.astype(jnp.float32)
  B, state_dim = state.shape
  action_dim = action.shape[1]

  bt = _batch_tile(B)
  Bp = -(-B // bt) * bt
  if Bp != B:
    pad = Bp - B
    state = jnp.pad(state, ((0, pad), (0, 0)))
    action = jnp.pad(action, ((0, pad), (0, 0)))

  w1s, w1a, b1 = packed["w1s"], packed["w1a"], packed["b1"]
  w2, b2 = packed["w2"], packed["b2"]
  w3, b3 = packed["w3"], packed["b3"]

  const = lambda i: (0, 0)            # weights: VMEM-resident across grid steps
  grid = (Bp // bt,)

  flops = 2 * Bp * ((state_dim + action_dim) * FUSED
                    + FUSED * FUSED + FUSED * OUT_PAD)
  bytes_accessed = (state.size * 4 + action.size * 4 + Bp * OUT_PAD * 4
                    + sum(int(p.size) * p.dtype.itemsize for p in packed.values()))

  out = pl.pallas_call(
      _critic_kernel,
      out_shape=jax.ShapeDtypeStruct((Bp, OUT_PAD), jnp.float32),
      grid=grid,
      in_specs=[
          pl.BlockSpec((bt, state_dim), lambda i: (i, 0)),
          pl.BlockSpec((bt, action_dim), lambda i: (i, 0)),
          pl.BlockSpec(w1s.shape, const),
          pl.BlockSpec(w1a.shape, const),
          pl.BlockSpec(b1.shape, const),
          pl.BlockSpec(w2.shape, const),
          pl.BlockSpec(b2.shape, const),
          pl.BlockSpec(w3.shape, const),
          pl.BlockSpec(b3.shape, const),
      ],
      out_specs=pl.BlockSpec((bt, OUT_PAD), lambda i: (i, 0)),
      compiler_params=pltpu.CompilerParams(
          dimension_semantics=("parallel",)),
      cost_estimate=pl.CostEstimate(
          flops=flops, transcendentals=0, bytes_accessed=bytes_accessed),
  )(state, action, w1s, w1a, b1, w2, b2, w3, b3)

  q1 = out[:B, 0:1]
  q2 = out[:B, 1:2]
  return q1, q2


def critic_forward_ref_packed(state, action, packed):
  """f32 reference over the packed (bf16-rounded) weights."""
  f32 = lambda x: x.astype(jnp.float32)
  h = jax.nn.relu(state @ f32(packed["w1s"]) + action @ f32(packed["w1a"])
                  + packed["b1"])
  h = jax.nn.relu(h @ f32(packed["w2"]) + packed["b2"])
  out = h @ f32(packed["w3"]) + packed["b3"]
  return out[:, 0:1], out[:, 1:2]


def critic_forward_ref_f32(state, action, params):
  """Pure-f32 reference matching the original PyTorch module exactly."""
  sa = jnp.concatenate([state, action], axis=1).astype(jnp.float32)
  (w1, b1), (w2, b2), (w3, b3), (w4, b4), (w5, b5), (w6, b6) = params
  h = jax.nn.relu(sa @ w1 + b1)
  h = jax.nn.relu(h @ w2 + b2)
  q1 = h @ w3 + b3
  g = jax.nn.relu(sa @ w4 + b4)
  g = jax.nn.relu(g @ w5 + b5)
  q2 = g @ w6 + b6
  return q1, q2


if __name__ == "__main__":
  # HalfCheetahBulletEnv-v0: observation dim 26, action dim 6.
  state_dim, action_dim = 26, 6
  batch = 8

  key = jax.random.PRNGKey(0)
  k_params, k_state, k_action = jax.random.split(key, 3)

  params = init_critic_params(k_params, state_dim, action_dim)
  packed = pack_critic_params(params, state_dim, action_dim)

  state = jax.random.normal(k_state, (batch, state_dim), jnp.float32)
  action = jax.random.uniform(k_action, (batch, action_dim), jnp.float32,
                              minval=-1.0, maxval=1.0)

  q1, q2 = critic_forward(state, action, packed)
  q1 = jax.block_until_ready(q1)
  q2 = jax.block_until_ready(q2)
  assert q1.shape == (batch, 1) and q2.shape == (batch, 1)

  # Check against the packed-weight reference (only bf16-activation rounding).
  q1_p, q2_p = critic_forward_ref_packed(state, action, packed)
  assert jnp.allclose(q1, q1_p, atol=3e-2, rtol=3e-2)
  assert jnp.allclose(q2, q2_p, atol=3e-2, rtol=3e-2)

  # Check against the original f32 module semantics (adds bf16 weight rounding).
  q1_f, q2_f = critic_forward_ref_f32(state, action, params)
  assert jnp.allclose(q1, q1_f, atol=8e-2, rtol=8e-2)
  assert jnp.allclose(q2, q2_f, atol=8e-2, rtol=8e-2)

  print("KERNEL_OK")
</pallas_src>

<mosaic_0001>
module attributes {stable_mosaic.version = 11 : i64} {
  func.func @_critic_kernel(%arg0: i32, %arg1: memref<8x26xf32, #tpu.memory_space<vmem>>, %arg2: memref<8x6xf32, #tpu.memory_space<vmem>>, %arg3: memref<26x512xbf16, #tpu.memory_space<vmem>>, %arg4: memref<6x512xbf16, #tpu.memory_space<vmem>>, %arg5: memref<1x512xf32, #tpu.memory_space<vmem>>, %arg6: memref<512x512xbf16, #tpu.memory_space<vmem>>, %arg7: memref<1x512xf32, #tpu.memory_space<vmem>>, %arg8: memref<512x128xbf16, #tpu.memory_space<vmem>>, %arg9: memref<1x128xf32, #tpu.memory_space<vmem>>, %arg10: memref<8x128xf32, #tpu.memory_space<vmem>>) attributes {dimension_semantics = [#tpu.dimension_semantics<parallel>], iteration_bounds = array<i64: 1>, scalar_prefetch = 0 : i64, scratch_operands = 0 : i64, tpu.core_type = #tpu.core_type<tc>, window_params = [{transform_indices = @transform_0, window_bounds = array<i64: 8, 26>}, {transform_indices = @transform_1, window_bounds = array<i64: 8, 6>}, {pipeline_mode = #tpu.pipeline_mode<synchronous>, transform_indices = @transform_2, window_bounds = array<i64: 26, 512>}, {pipeline_mode = #tpu.pipeline_mode<synchronous>, transform_indices = @transform_3, window_bounds = array<i64: 6, 512>}, {pipeline_mode = #tpu.pipeline_mode<synchronous>, transform_indices = @transform_4, window_bounds = array<i64: 1, 512>}, {pipeline_mode = #tpu.pipeline_mode<synchronous>, transform_indices = @transform_5, window_bounds = array<i64: 512, 512>}, {pipeline_mode = #tpu.pipeline_mode<synchronous>, transform_indices = @transform_6, window_bounds = array<i64: 1, 512>}, {pipeline_mode = #tpu.pipeline_mode<synchronous>, transform_indices = @transform_7, window_bounds = array<i64: 512, 128>}, {pipeline_mode = #tpu.pipeline_mode<synchronous>, transform_indices = @transform_8, window_bounds = array<i64: 1, 128>}, {transform_indices = @transform_9, window_bounds = array<i64: 8, 128>}]} {
    %c0 = arith.constant 0 : index
    %c0_0 = arith.constant 0 : index
    %0 = vector.load %arg1[%c0, %c0_0] : memref<8x26xf32, #tpu.memory_space<vmem>>, vector<8x26xf32>
    %1 = arith.truncf %0 : vector<8x26xf32> to vector<8x26xbf16>
    %c0_1 = arith.constant 0 : index
    %c0_2 = arith.constant 0 : index
    %2 = vector.load %arg2[%c0_1, %c0_2] : memref<8x6xf32, #tpu.memory_space<vmem>>, vector<8x6xf32>
    %3 = arith.truncf %2 : vector<8x6xf32> to vector<8x6xbf16>
    %c0_3 = arith.constant 0 : index
    %c0_4 = arith.constant 0 : index
    %4 = vector.load %arg3[%c0_3, %c0_4] : memref<26x512xbf16, #tpu.memory_space<vmem>>, vector<26x512xbf16>
    %cst = arith.constant dense<0.000000e+00> : vector<8x512xf32>
    %5 = tpu.matmul %1, %4, %cst {dimension_numbers = #tpu.dot_dimension_numbers<[1], [0], [0], [1], [0, 0, 1, 1], [], []>} : vector<8x26xbf16>, vector<26x512xbf16>, vector<8x512xf32> -> vector<8x512xf32>
    %c0_5 = arith.constant 0 : index
    %c0_6 = arith.constant 0 : index
    %6 = vector.load %arg4[%c0_5, %c0_6] : memref<6x512xbf16, #tpu.memory_space<vmem>>, vector<6x512xbf16>
    %cst_7 = arith.constant dense<0.000000e+00> : vector<8x512xf32>
    %7 = tpu.matmul %3, %6, %cst_7 {dimension_numbers = #tpu.dot_dimension_numbers<[1], [0], [0], [1], [0, 0, 1, 1], [], []>} : vector<8x6xbf16>, vector<6x512xbf16>, vector<8x512xf32> -> vector<8x512xf32>
    %8 = arith.addf %5, %7 : vector<8x512xf32>
    %c0_8 = arith.constant 0 : index
    %c0_9 = arith.constant 0 : index
    %9 = vector.load %arg5[%c0_8, %c0_9] : memref<1x512xf32, #tpu.memory_space<vmem>>, vector<1x512xf32>
    %10 = vector.broadcast %9 : vector<1x512xf32> to vector<8x512xf32>
    %11 = arith.addf %8, %10 : vector<8x512xf32>
    %cst_10 = arith.constant 0.000000e+00 : f32
    %12 = vector.broadcast %cst_10 : f32 to vector<8x512xf32>
    %13 = arith.maximumf %11, %12 : vector<8x512xf32>
    %14 = arith.truncf %13 : vector<8x512xf32> to vector<8x512xbf16>
    %c0_11 = arith.constant 0 : index
    %c0_12 = arith.constant 0 : index
    %15 = vector.load %arg6[%c0_11, %c0_12] : memref<512x512xbf16, #tpu.memory_space<vmem>>, vector<512x512xbf16>
    %cst_13 = arith.constant dense<0.000000e+00> : vector<8x512xf32>
    %16 = tpu.matmul %14, %15, %cst_13 {dimension_numbers = #tpu.dot_dimension_numbers<[1], [0], [0], [1], [0, 0, 1, 1], [], []>} : vector<8x512xbf16>, vector<512x512xbf16>, vector<8x512xf32> -> vector<8x512xf32>
    %c0_14 = arith.constant 0 : index
    %c0_15 = arith.constant 0 : index
    %17 = vector.load %arg7[%c0_14, %c0_15] : memref<1x512xf32, #tpu.memory_space<vmem>>, vector<1x512xf32>
    %18 = vector.broadcast %17 : vector<1x512xf32> to vector<8x512xf32>
    %19 = arith.addf %16, %18 : vector<8x512xf32>
    %cst_16 = arith.constant 0.000000e+00 : f32
    %20 = vector.broadcast %cst_16 : f32 to vector<8x512xf32>
    %21 = arith.maximumf %19, %20 : vector<8x512xf32>
    %22 = arith.truncf %21 : vector<8x512xf32> to vector<8x512xbf16>
    %c0_17 = arith.constant 0 : index
    %c0_18 = arith.constant 0 : index
    %23 = vector.load %arg8[%c0_17, %c0_18] : memref<512x128xbf16, #tpu.memory_space<vmem>>, vector<512x128xbf16>
    %cst_19 = arith.constant dense<0.000000e+00> : vector<8x128xf32>
    %24 = tpu.matmul %22, %23, %cst_19 {dimension_numbers = #tpu.dot_dimension_numbers<[1], [0], [0], [1], [0, 0, 1, 1], [], []>} : vector<8x512xbf16>, vector<512x128xbf16>, vector<8x128xf32> -> vector<8x128xf32>
    %c0_20 = arith.constant 0 : index
    %c0_21 = arith.constant 0 : index
    %25 = vector.load %arg9[%c0_20, %c0_21] : memref<1x128xf32, #tpu.memory_space<vmem>>, vector<1x128xf32>
    %26 = vector.broadcast %25 : vector<1x128xf32> to vector<8x128xf32>
    %27 = arith.addf %24, %26 : vector<8x128xf32>
    %c0_22 = arith.constant 0 : index
    %c0_23 = arith.constant 0 : index
    %28 = vector.load %arg10[%c0_22, %c0_23] : memref<8x128xf32, #tpu.memory_space<vmem>>, vector<8x128xf32>
    tpu.vector_store %arg10[%c0_22, %c0_23], %27 {strides = array<i32>} : memref<8x128xf32, #tpu.memory_space<vmem>>, vector<8x128xf32>,
    return
  }
  func.func @transform_0(%arg0: i32) -> (i32, i32) {
    %c0_i32 = arith.constant 0 : i32
    %c0_i32_0 = arith.constant 0 : i32
    return %arg0, %c0_i32 : i32, i32
  }
  func.func @transform_1(%arg0: i32) -> (i32, i32) {
    %c0_i32 = arith.constant 0 : i32
    %c0_i32_0 = arith.constant 0 : i32
    return %arg0, %c0_i32 : i32, i32
  }
  func.func @transform_2(%arg0: i32) -> (i32, i32) {
    %c0_i32 = arith.constant 0 : i32
    %c0_i32_0 = arith.constant 0 : i32
    %c0_i32_1 = arith.constant 0 : i32
    return %c0_i32, %c0_i32_0 : i32, i32
  }
  func.func @transform_3(%arg0: i32) -> (i32, i32) {
    %c0_i32 = arith.constant 0 : i32
    %c0_i32_0 = arith.constant 0 : i32
    %c0_i32_1 = arith.constant 0 : i32
    return %c0_i32, %c0_i32_0 : i32, i32
  }
  func.func @transform_4(%arg0: i32) -> (i32, i32) {
    %c0_i32 = arith.constant 0 : i32
    %c0_i32_0 = arith.constant 0 : i32
    %c0_i32_1 = arith.constant 0 : i32
    return %c0_i32, %c0_i32_0 : i32, i32
  }
  func.func @transform_5(%arg0: i32) -> (i32, i32) {
    %c0_i32 = arith.constant 0 : i32
    %c0_i32_0 = arith.constant 0 : i32
    %c0_i32_1 = arith.constant 0 : i32
    return %c0_i32, %c0_i32_0 : i32, i32
  }
  func.func @transform_6(%arg0: i32) -> (i32, i32) {
    %c0_i32 = arith.constant 0 : i32
    %c0_i32_0 = arith.constant 0 : i32
    %c0_i32_1 = arith.constant 0 : i32
    return %c0_i32, %c0_i32_0 : i32, i32
  }
  func.func @transform_7(%arg0: i32) -> (i32, i32) {
    %c0_i32 = arith.constant 0 : i32
    %c0_i32_0 = arith.constant 0 : i32
    %c0_i32_1 = arith.constant 0 : i32
    return %c0_i32, %c0_i32_0 : i32, i32
  }
  func.func @transform_8(%arg0: i32) -> (i32, i32) {
    %c0_i32 = arith.constant 0 : i32
    %c0_i32_0 = arith.constant 0 : i32
    %c0_i32_1 = arith.constant 0 : i32
    return %c0_i32, %c0_i32_0 : i32, i32
  }
  func.func @transform_9(%arg0: i32) -> (i32, i32) {
    %c0_i32 = arith.constant 0 : i32
    %c0_i32_0 = arith.constant 0 : i32
    return %arg0, %c0_i32 : i32, i32
  }
}

</mosaic_0001>

<llo_original>
// kernel: critic_forward.1
$region0: #{critic_forward.1}
  #allocation0 [shape = 'u32[]', space=smem, size = 0x4, offset = 0x4, fixed_abs, tag = 'smem constant byte address 0x4 - core index']
  #allocation1 [shape = 'u32[144,128]{1,0:T(1,128)}', space=vmem, size = 0x12000, scoped, tag = 'internal scratch']
  %s0 = inlined_call_operand.hbm [shape: f32[8,26], index: 0, kind: input, shape index: {}]
  %s1 = inlined_call_operand.hbm [shape: f32[8,6], index: 1, kind: input, shape index: {}]
  %s2 = inlined_call_operand.hbm [shape: bf16[26,512], index: 2, kind: input, shape index: {}]
  %s3 = inlined_call_operand.hbm [shape: bf16[6,512], index: 3, kind: input, shape index: {}]
  %s4 = inlined_call_operand.hbm [shape: f32[1,512], index: 4, kind: input, shape index: {}]
  %s5 = inlined_call_operand.hbm [shape: bf16[512,512], index: 5, kind: input, shape index: {}]
  %s6 = inlined_call_operand.vmem [shape: f32[1,512], index: 6, kind: input, shape index: {}]
  %s7 = inlined_call_operand.hbm [shape: bf16[512,128], index: 7, kind: input, shape index: {}]
  %s8 = inlined_call_operand.vmem [shape: f32[1,128], index: 8, kind: input, shape index: {}]
  %s9 = inlined_call_operand.vmem [shape: f32[8,128], index: 9, kind: output, shape index: {}]
  %s10 = sld [smem:[#allocation0]]
  $region74: #{critic_forward.1} parent=0
    _
  %s12 = ssub.s32 1, %s10
  %s13 = scalar_select 0, %s12, %s10
  $region1: #{critic_forward.1} parent=0
    #allocation2 [shape = 'u8[4096]{0}', space=vmem, size = 0x1000, scoped, tag = 'input window, operand 0, single buffered']
    #allocation3 [shape = 's32[1]{0}', space=sflag, size = 0x4, scoped, tag = 'scoped memory for critic_forward.1']
    #allocation4 [shape = 'u8[4096]{0}', space=vmem, size = 0x1000, scoped, tag = 'input window, operand 1, single buffered']
    #allocation5 [shape = 's32[1]{0}', space=sflag, size = 0x4, scoped, tag = 'scoped memory for critic_forward.1']
    #allocation6 [shape = 'u8[32768]{0}', space=vmem, size = 0x8000, scoped, tag = 'input window, operand 2, single buffered']
    #allocation7 [shape = 'u8[8192]{0}', space=vmem, size = 0x2000, scoped, tag = 'input window, operand 3, single buffered']
    #allocation8 [shape = 's32[1]{0}', space=sflag, size = 0x4, scoped, tag = 'scoped memory for critic_forward.1']
    #allocation9 [shape = 'u8[2048]{0}', space=vmem, size = 0x800, scoped, tag = 'input window, operand 4, single buffered']
    #allocation10 [shape = 'u8[524288]{0}', space=vmem, size = 0x80000, scoped, tag = 'input window, operand 5, single buffered']
    #allocation11 [shape = 's32[1]{0}', space=sflag, size = 0x4, scoped, tag = 'scoped memory for critic_forward.1']
    #allocation12 [shape = 'u8[131072]{0}', space=vmem, size = 0x20000, scoped, tag = 'input window, operand 7, single buffered']
    %14 = vsyncpa [#allocation3], 0
    %15 = vsyncpa [#allocation5], 0
    %16 = vsyncpa [#allocation8], 0
    %17 = vsyncpa [#allocation11], 0
    // Predicated region
    $region2: #{critic_forward.1} parent=1 // pred_check
      _
    $region3: #{critic_forward.1} parent=1 // pred_check_branch
      %19 = sbr.rel (0) target = $region5
    $region4: #{critic_forward.1} parent=1 // pred_region
      %s21 = ssub.s32 128, 128
      %22 = vsyncadd [#allocation3], %s21
      %s24 = sshll.u32 [#allocation2], 4
      %s25 = int_to_ptr.vmem [resolvable:$true] %s24
      %27 = dma.hbm_to_vmem [thread:$0]  %s0, 128, %s25, [#allocation3]
    $region5: #{critic_forward.1} parent=1 // pred_fallthru
      _
    // Predicated region
    $region6: #{critic_forward.1} parent=1 // pred_check
      _
    $region7: #{critic_forward.1} parent=1 // pred_check_branch
      %29 = sbr.rel (0) target = $region9
    $region8: #{critic_forward.1} parent=1 // pred_region
      %s31 = ssub.s32 128, 128
      %32 = vsyncadd [#allocation5], %s31
      %s34 = sshll.u32 [#allocation4], 4
      %s35 = int_to_ptr.vmem [resolvable:$true] %s34
      %37 = dma.hbm_to_vmem [thread:$0]  %s1, 128, %s35, [#allocation5]
    $region9: #{critic_forward.1} parent=1 // pred_fallthru
      _
    // Predicated region
    $region10: #{critic_forward.1} parent=1 // pred_check
      _
    $region11: #{critic_forward.1} parent=1 // pred_check_branch
      %39 = sbr.rel (0) target = $region13
    $region12: #{critic_forward.1} parent=1 // pred_region
      %s41 = ssub.s32 1024, 1024
      %42 = vsyncadd [#allocation5], %s41
      %s43 = sshll.u32 [#allocation6], 4
      %s44 = int_to_ptr.vmem [resolvable:$true] %s43
      %49 = dma.hbm_to_vmem [thread:$0]  %s2, 1024, %s44, [#allocation5], 256, 256, 16
    $region13: #{critic_forward.1} parent=1 // pred_fallthru
      _
    // Predicated region
    $region14: #{critic_forward.1} parent=1 // pred_check
      _
    $region15: #{critic_forward.1} parent=1 // pred_check_branch
      %51 = sbr.rel (0) target = $region17
    $region16: #{critic_forward.1} parent=1 // pred_region
      %s53 = ssub.s32 256, 256
      %54 = vsyncadd [#allocation8], %s53
      %s56 = sshll.u32 [#allocation7], 4
      %s57 = int_to_ptr.vmem [resolvable:$true] %s56
      %59 = dma.hbm_to_vmem [thread:$0]  %s3, 256, %s57, [#allocation8]
    $region17: #{critic_forward.1} parent=1 // pred_fallthru
      _
    // Predicated region
    $region18: #{critic_forward.1} parent=1 // pred_check
      _
    $region19: #{critic_forward.1} parent=1 // pred_check_branch
      %61 = sbr.rel (0) target = $region21
    $region20: #{critic_forward.1} parent=1 // pred_region
      %s63 = ssub.s32 64, 64
      %64 = vsyncadd [#allocation8], %s63
      %s66 = sshll.u32 [#allocation9], 4
      %s67 = int_to_ptr.vmem [resolvable:$true] %s66
      %69 = dma.hbm_to_vmem [thread:$0]  %s4, 64, %s67, [#allocation8]
    $region21: #{critic_forward.1} parent=1 // pred_fallthru
      _
    // Predicated region
    $region22: #{critic_forward.1} parent=1 // pred_check
      _
    $region23: #{critic_forward.1} parent=1 // pred_check_branch
      %71 = sbr.rel (0) target = $region25
    $region24: #{critic_forward.1} parent=1 // pred_region
      %s73 = ssub.s32 16384, 16384
      %74 = vsyncadd [#allocation11], %s73
      %s75 = sshll.u32 [#allocation10], 4
      %s76 = int_to_ptr.vmem [resolvable:$true] %s75
      %81 = dma.hbm_to_vmem [thread:$0]  %s5, 16384, %s76, [#allocation11], 256, 256, 16
    $region25: #{critic_forward.1} parent=1 // pred_fallthru
      _
    // Predicated region
    $region26: #{critic_forward.1} parent=1 // pred_check
      _
    $region27: #{critic_forward.1} parent=1 // pred_check_branch
      %83 = sbr.rel (0) target = $region29
    $region28: #{critic_forward.1} parent=1 // pred_region
      _
    $region29: #{critic_forward.1} parent=1 // pred_fallthru
      _
    // Predicated region
    $region30: #{critic_forward.1} parent=1 // pred_check
      _
    $region31: #{critic_forward.1} parent=1 // pred_check_branch
      %85 = sbr.rel (0) target = $region33
    $region32: #{critic_forward.1} parent=1 // pred_region
      %s87 = ssub.s32 4096, 4096
      %88 = vsyncadd [#allocation11], %s87
      %s89 = sshll.u32 [#allocation12], 4
      %s90 = int_to_ptr.vmem [resolvable:$true] %s89
      %95 = dma.hbm_to_vmem [thread:$0]  %s7, 4096, %s90, [#allocation11], 64, 64, 4
    $region33: #{critic_forward.1} parent=1 // pred_fallthru
      _
    // Predicated region
    $region34: #{critic_forward.1} parent=1 // pred_check
      _
    $region35: #{critic_forward.1} parent=1 // pred_check_branch
      %97 = sbr.rel (0) target = $region37
    $region36: #{critic_forward.1} parent=1 // pred_region
      _
    $region37: #{critic_forward.1} parent=1 // pred_fallthru
      _
    // Predicated region
    $region38: #{critic_forward.1} parent=1 // pred_check
      _
    $region39: #{critic_forward.1} parent=1 // pred_check_branch
      %99 = sbr.rel (0) target = $region41
    $region40: #{critic_forward.1} parent=1 // pred_region
      %100 = dma.done [#allocation3], 128
    $region41: #{critic_forward.1} parent=1 // pred_fallthru
      _
    // Predicated region
    $region42: #{critic_forward.1} parent=1 // pred_check
      _
    $region43: #{critic_forward.1} parent=1 // pred_check_branch
      %102 = sbr.rel (0) target = $region45
    $region44: #{critic_forward.1} parent=1 // pred_region
      %103 = dma.done [#allocation5], 128
    $region45: #{critic_forward.1} parent=1 // pred_fallthru
      _
    // Predicated region
    $region46: #{critic_forward.1} parent=1 // pred_check
      _
    $region47: #{critic_forward.1} parent=1 // pred_check_branch
      %105 = sbr.rel (0) target = $region49
    $region48: #{critic_forward.1} parent=1 // pred_region
      %106 = dma.done [#allocation5], 1024
    $region49: #{critic_forward.1} parent=1 // pred_fallthru
      _
    // Predicated region
    $region50: #{critic_forward.1} parent=1 // pred_check
      _
    $region51: #{critic_forward.1} parent=1 // pred_check_branch
      %108 = sbr.rel (0) target = $region53
    $region52: #{critic_forward.1} parent=1 // pred_region
      %109 = dma.done [#allocation8], 256
    $region53: #{critic_forward.1} parent=1 // pred_fallthru
      _
    // Predicated region
    $region54: #{critic_forward.1} parent=1 // pred_check
      _
    $region55: #{critic_forward.1} parent=1 // pred_check_branch
      %111 = sbr.rel (0) target = $region57
    $region56: #{critic_forward.1} parent=1 // pred_region
      %112 = dma.done [#allocation8], 64
    $region57: #{critic_forward.1} parent=1 // pred_fallthru
      _
    // Predicated region
    $region58: #{critic_forward.1} parent=1 // pred_check
      _
    $region59: #{critic_forward.1} parent=1 // pred_check_branch
      %114 = sbr.rel (0) target = $region61
    $region60: #{critic_forward.1} parent=1 // pred_region
      %115 = dma.done [#allocation11], 16384
    $region61: #{critic_forward.1} parent=1 // pred_fallthru
      _
    // Predicated region
    $region62: #{critic_forward.1} parent=1 // pred_check
      _
    $region63: #{critic_forward.1} parent=1 // pred_check_branch
      %117 = sbr.rel (0) target = $region65
    $region64: #{critic_forward.1} parent=1 // pred_region
      %118 = dma.done [#allocation11], 4096
    $region65: #{critic_forward.1} parent=1 // pred_fallthru
      _
    %v120 = vld [vmem:[#allocation2] sm:$0xff]
    %v121 = vpack.c.bf16 %v120, %v120
    %v122 = vld [vmem:[#allocation4] sm:$0xff]
    %v123 = vpack.c.bf16 %v122, %v122
    %v124 = vld [vmem:[#allocation6] sm:$0xff]
    %v125 = vld [vmem:[#allocation6 + $0x8] sm:$0xff]
    %v126 = vld [vmem:[#allocation6 + $0x10] sm:$0xff]
    %v127 = vld [vmem:[#allocation6 + $0x18] sm:$0xff]
    %v128 = vld [vmem:[#allocation6 + $0x20] sm:$0xff]
    %v129 = vld [vmem:[#allocation6 + $0x28] sm:$0xff]
    %v130 = vld [vmem:[#allocation6 + $0x30] sm:$0x11]
    %v131 = vld [vmem:[#allocation6 + $0x38] sm:$0x11]
    %v132 = vld [vmem:[#allocation7] sm:$0x77]
    %v133 = vld [vmem:[#allocation7 + $0x8] sm:$0x77]
    %v136 = vunpack.c.l.b16 %v132
    %v137 = vunpack.c.h.b16 %v132
    %v138 = vunpack.c.l.b16 %v133
    %v139 = vunpack.c.h.b16 %v133
    %v140 = vpack.c.b16 %v136, %v136
    %v141 = vpack.c.b16 %v137, %v137
    %v142 = vpack.c.b16 %v138, %v138
    %v143 = vpack.c.b16 %v139, %v139
    %vm144 = vcmask 48128
    %v146 = vsel %vm144, %v123, 0
    %vm148 = vcmask 1042432
    %v150 = vsel %vm148, %v140, 0
    %v153 = vsel %vm148, %v141, 0
    %v156 = vsel %vm148, %v142, 0
    %v159 = vsel %vm148, %v143, 0
    %161 = vmatprep.subr.bf16.mxu0 0
    %162 = vmatpush1.bf16.msra.mxu0 0
    %163 = vmatprep.subr.bf16.mxu0 0
    %164 = vmatpush1.bf16.msra.mxu0 0
    %165 = vmatprep.subr.bf16.mxu0 0
    %166 = vmatpush1.bf16.msra.mxu0 0
    %167 = vmatprep.subr.bf16.mxu0 0
    %168 = vmatpush1.bf16.msra.mxu0 0
    %169 = vmatprep.subr.bf16.mxu0 0
    %170 = vmatpush1.bf16.msra.mxu0 0
    %171 = vmatprep.subr.bf16.mxu0 0
    %172 = vmatpush1.bf16.msra.mxu0 0
    %173 = vmatprep.subr.bf16.mxu0 0
    %174 = vmatpush1.bf16.msra.mxu0 0
    %175 = vmatprep.subr.bf16.mxu0 %v153
    %176 = vmatpush1.bf16.msra.mxu0 %v150
    %177 = vmatprep.subr.bf16.mxu0 0
    %178 = vmatpush2.bf16.msra.mxu0 0
    %179 = vmatprep.subr.bf16.mxu0 0
    %180 = vmatpush2.bf16.msra.mxu0 0
    %181 = vmatprep.subr.bf16.mxu0 0
    %182 = vmatpush2.bf16.msra.mxu0 0
    %183 = vmatprep.subr.bf16.mxu0 0
    %184 = vmatpush2.bf16.msra.mxu0 0
    %185 = vmatprep.subr.bf16.mxu0 0
    %186 = vmatpush2.bf16.msra.mxu0 0
    %187 = vmatprep.subr.bf16.mxu0 0
    %188 = vmatpush2.bf16.msra.mxu0 0
    %189 = vmatprep.subr.bf16.mxu0 0
    %190 = vmatpush2.bf16.msra.mxu0 0
    %191 = vmatprep.subr.bf16.mxu0 0
    %192 = vmatpush2.bf16.msra.mxu0 0
    %193 = vmatprep.mubr.bf16.mxu0 0
    %194 = vmatmul.mubr.bf16.gmra.mxu0 %v146
    %v195 = vpop.f32.mrf.mxu0
    %v196 = vadd.f32 0.0, %v195
    %v197 = vpop.f32.mrf.mxu0
    %v198 = vadd.f32 0.0, %v197
    %v199 = vpop.f32.mrf.mxu0
    %v200 = vpop.f32.mrf.mxu0
    %201 = vdwg.mxu0
    %202 = vmatprep.subr.bf16.mxu0 0
    %203 = vmatpush1.bf16.msra.mxu0 0
    %204 = vmatprep.subr.bf16.mxu0 0
    %205 = vmatpush1.bf16.msra.mxu0 0
    %206 = vmatprep.subr.bf16.mxu0 0
    %207 = vmatpush1.bf16.msra.mxu0 0
    %208 = vmatprep.subr.bf16.mxu0 0
    %209 = vmatpush1.bf16.msra.mxu0 0
    %210 = vmatprep.subr.bf16.mxu0 0
    %211 = vmatpush1.bf16.msra.mxu0 0
    %212 = vmatprep.subr.bf16.mxu0 0
    %213 = vmatpush1.bf16.msra.mxu0 0
    %214 = vmatprep.subr.bf16.mxu0 0
    %215 = vmatpush1.bf16.msra.mxu0 0
    %216 = vmatprep.subr.bf16.mxu0 %v159
    %217 = vmatpush1.bf16.msra.mxu0 %v156
    %218 = vmatprep.subr.bf16.mxu0 0
    %219 = vmatpush2.bf16.msra.mxu0 0
    %220 = vmatprep.subr.bf16.mxu0 0
    %221 = vmatpush2.bf16.msra.mxu0 0
    %222 = vmatprep.subr.bf16.mxu0 0
    %223 = vmatpush2.bf16.msra.mxu0 0
    %224 = vmatprep.subr.bf16.mxu0 0
    %225 = vmatpush2.bf16.msra.mxu0 0
    %226 = vmatprep.subr.bf16.mxu0 0
    %227 = vmatpush2.bf16.msra.mxu0 0
    %228 = vmatprep.subr.bf16.mxu0 0
    %229 = vmatpush2.bf16.msra.mxu0 0
    %230 = vmatprep.subr.bf16.mxu0 0
    %231 = vmatpush2.bf16.msra.mxu0 0
    %232 = vmatprep.subr.bf16.mxu0 0
    %233 = vmatpush2.bf16.msra.mxu0 0
    %234 = vmatprep.mubr.bf16.mxu0 0
    %235 = vmatmul.mubr.bf16.gmra.mxu0 %v146
    %v236 = vpop.f32.mrf.mxu0
    %v237 = vadd.f32 0.0, %v236
    %v238 = vpop.f32.mrf.mxu0
    %v239 = vadd.f32 0.0, %v238
    %v240 = vpop.f32.mrf.mxu0
    %v241 = vpop.f32.mrf.mxu0
    %242 = vdwg.mxu0
    %v251 = vunpack.c.l.b16 %v124
    %v252 = vunpack.c.h.b16 %v124
    %v253 = vunpack.c.l.b16 %v125
    %v254 = vunpack.c.h.b16 %v125
    %v255 = vunpack.c.l.b16 %v126
    %v256 = vunpack.c.h.b16 %v126
    %v257 = vunpack.c.l.b16 %v127
    %v258 = vunpack.c.h.b16 %v127
    %v259 = vunpack.c.l.b16 %v128
    %v260 = vunpack.c.h.b16 %v128
    %v261 = vunpack.c.l.b16 %v129
    %v262 = vunpack.c.h.b16 %v129
    %v263 = vunpack.c.l.b16 %v130
    %v264 = vunpack.c.h.b16 %v130
    %v265 = vunpack.c.l.b16 %v131
    %v266 = vunpack.c.h.b16 %v131
    %v267 = vpack.c.b16 %v255, %v251
    %v268 = vpack.c.b16 %v256, %v252
    %v269 = vpack.c.b16 %v257, %v253
    %v270 = vpack.c.b16 %v258, %v254
    %v271 = vpack.c.b16 %v263, %v259
    %v272 = vpack.c.b16 %v264, %v260
    %v273 = vpack.c.b16 %v265, %v261
    %v274 = vpack.c.b16 %v266, %v262
    %vm279 = vcmask 211968
    %v281 = vsel %vm279, %v121, 0
    %vm283 = vcmask 1044480
    %v285 = vsel %vm283, %v271, 0
    %v288 = vsel %vm283, %v272, 0
    %v291 = vsel %vm283, %v273, 0
    %v294 = vsel %vm283, %v274, 0
    %296 = vmatprep.subr.bf16.mxu0 0
    %297 = vmatpush1.bf16.msra.mxu0 0
    %298 = vmatprep.subr.bf16.mxu0 0
    %299 = vmatpush1.bf16.msra.mxu0 0
    %300 = vmatprep.subr.bf16.mxu0 0
    %301 = vmatpush1.bf16.msra.mxu0 0
    %302 = vmatprep.subr.bf16.mxu0 0
    %303 = vmatpush1.bf16.msra.mxu0 0
    %304 = vmatprep.subr.bf16.mxu0 0
    %305 = vmatpush1.bf16.msra.mxu0 0
    %306 = vmatprep.subr.bf16.mxu0 0
    %307 = vmatpush1.bf16.msra.mxu0 0
    %308 = vmatprep.subr.bf16.mxu0 %v288
    %309 = vmatpush1.bf16.msra.mxu0 %v285
    %310 = vmatprep.subr.bf16.mxu0 %v268
    %311 = vmatpush1.bf16.msra.mxu0 %v267
    %312 = vmatprep.subr.bf16.mxu0 0
    %313 = vmatpush2.bf16.msra.mxu0 0
    %314 = vmatprep.subr.bf16.mxu0 0
    %315 = vmatpush2.bf16.msra.mxu0 0
    %316 = vmatprep.subr.bf16.mxu0 0
    %317 = vmatpush2.bf16.msra.mxu0 0
    %318 = vmatprep.subr.bf16.mxu0 0
    %319 = vmatpush2.bf16.msra.mxu0 0
    %320 = vmatprep.subr.bf16.mxu0 0
    %321 = vmatpush2.bf16.msra.mxu0 0
    %322 = vmatprep.subr.bf16.mxu0 0
    %323 = vmatpush2.bf16.msra.mxu0 0
    %324 = vmatprep.subr.bf16.mxu0 0
    %325 = vmatpush2.bf16.msra.mxu0 0
    %326 = vmatprep.subr.bf16.mxu0 0
    %327 = vmatpush2.bf16.msra.mxu0 0
    %328 = vmatprep.mubr.bf16.mxu0 0
    %329 = vmatmul.mubr.bf16.gmra.mxu0 %v281
    %v330 = vpop.f32.mrf.mxu0
    %v331 = vadd.f32 %v196, %v330
    %v332 = vpop.f32.mrf.mxu0
    %v333 = vadd.f32 %v198, %v332
    %v334 = vpop.f32.mrf.mxu0
    %v335 = vpop.f32.mrf.mxu0
    %336 = vdwg.mxu0
    %337 = vmatprep.subr.bf16.mxu0 0
    %338 = vmatpush1.bf16.msra.mxu0 0
    %339 = vmatprep.subr.bf16.mxu0 0
    %340 = vmatpush1.bf16.msra.mxu0 0
    %341 = vmatprep.subr.bf16.mxu0 0
    %342 = vmatpush1.bf16.msra.mxu0 0
    %343 = vmatprep.subr.bf16.mxu0 0
    %344 = vmatpush1.bf16.msra.mxu0 0
    %345 = vmatprep.subr.bf16.mxu0 0
    %346 = vmatpush1.bf16.msra.mxu0 0
    %347 = vmatprep.subr.bf16.mxu0 0
    %348 = vmatpush1.bf16.msra.mxu0 0
    %349 = vmatprep.subr.bf16.mxu0 %v294
    %350 = vmatpush1.bf16.msra.mxu0 %v291
    %351 = vmatprep.subr.bf16.mxu0 %v270
    %352 = vmatpush1.bf16.msra.mxu0 %v269
    %353 = vmatprep.subr.bf16.mxu0 0
    %354 = vmatpush2.bf16.msra.mxu0 0
    %355 = vmatprep.subr.bf16.mxu0 0
    %356 = vmatpush2.bf16.msra.mxu0 0
    %357 = vmatprep.subr.bf16.mxu0 0
    %358 = vmatpush2.bf16.msra.mxu0 0
    %359 = vmatprep.subr.bf16.mxu0 0
    %360 = vmatpush2.bf16.msra.mxu0 0
    %361 = vmatprep.subr.bf16.mxu0 0
    %362 = vmatpush2.bf16.msra.mxu0 0
    %363 = vmatprep.subr.bf16.mxu0 0
    %364 = vmatpush2.bf16.msra.mxu0 0
    %365 = vmatprep.subr.bf16.mxu0 0
    %366 = vmatpush2.bf16.msra.mxu0 0
    %367 = vmatprep.subr.bf16.mxu0 0
    %368 = vmatpush2.bf16.msra.mxu0 0
    %369 = vmatprep.mubr.bf16.mxu0 0
    %370 = vmatmul.mubr.bf16.gmra.mxu0 %v281
    %v371 = vpop.f32.mrf.mxu0
    %v372 = vadd.f32 %v237, %v371
    %v373 = vpop.f32.mrf.mxu0
    %v374 = vadd.f32 %v239, %v373
    %v375 = vpop.f32.mrf.mxu0
    %v376 = vpop.f32.mrf.mxu0
    %377 = vdwg.mxu0
    %v378 = vld [vmem:[#allocation9] sm:$0xf]
    %v380 = vlaneseq
    %v381 = vshrl.u32 %v380, 7
    %v382 = vsub.s32 0, %v381
    %v383 = vrot.slane %v378, %v382
    %v384 = vlaneseq
    %v385 = vshrl.u32 %v384, 7
    %v386 = vsub.s32 1, %v385
    %v387 = vrot.slane %v378, %v386
    %v388 = vlaneseq
    %v389 = vshrl.u32 %v388, 7
    %v390 = vsub.s32 2, %v389
    %v391 = vrot.slane %v378, %v390
    %v392 = vlaneseq
    %v393 = vshrl.u32 %v392, 7
    %v394 = vsub.s32 3, %v393
    %v395 = vrot.slane %v378, %v394
    %v400 = vadd.f32 %v331, %v383
    %v401 = vadd.f32 %v333, %v387
    %v402 = vadd.f32 %v372, %v391
    %v403 = vadd.f32 %v374, %v395
    %v404 = vmax.f32 %v400, 0.0
    %v405 = vmax.f32 %v401, 0.0
    %v406 = vmax.f32 %v402, 0.0
    %v407 = vmax.f32 %v403, 0.0
    %v408 = vpack.c.bf16 %v404, %v404
    %v409 = vpack.c.bf16 %v405, %v405
    %v410 = vpack.c.bf16 %v406, %v406
    %v411 = vpack.c.bf16 %v407, %v407
    %v412 = vld [vmem:[#allocation10] sm:$0xff]
    %v413 = vld [vmem:[#allocation10 + $0x8] sm:$0xff]
    %v414 = vld [vmem:[#allocation10 + $0x10] sm:$0xff]
    %v415 = vld [vmem:[#allocation10 + $0x18] sm:$0xff]
    %v416 = vld [vmem:[#allocation10 + $0x20] sm:$0xff]
    %v417 = vld [vmem:[#allocation10 + $0x28] sm:$0xff]
    %v418 = vld [vmem:[#allocation10 + $0x30] sm:$0xff]
    %v419 = vld [vmem:[#allocation10 + $0x38] sm:$0xff]
    %v420 = vld [vmem:[#allocation10 + $0x40] sm:$0xff]
    %v421 = vld [vmem:[#allocation10 + $0x48] sm:$0xff]
    %v422 = vld [vmem:[#allocation10 + $0x50] sm:$0xff]
    %v423 = vld [vmem:[#allocation10 + $0x58] sm:$0xff]
    %v424 = vld [vmem:[#allocation10 + $0x60] sm:$0xff]
    %v425 = vld [vmem:[#allocation10 + $0x68] sm:$0xff]
    %v426 = vld [vmem:[#allocation10 + $0x70] sm:$0xff]
    %v427 = vld [vmem:[#allocation10 + $0x78] sm:$0xff]
    %v428 = vld [vmem:[#allocation10 + $0x80] sm:$0xff]
    %v429 = vld [vmem:[#allocation10 + $0x88] sm:$0xff]
    %v430 = vld [vmem:[#allocation10 + $0x90] sm:$0xff]
    %v431 = vld [vmem:[#allocation10 + $0x98] sm:$0xff]
    %v432 = vld [vmem:[#allocation10 + $0xa0] sm:$0xff]
    %v433 = vld [vmem:[#allocation10 + $0xa8] sm:$0xff]
    %v434 = vld [vmem:[#allocation10 + $0xb0] sm:$0xff]
    %v435 = vld [vmem:[#allocation10 + $0xb8] sm:$0xff]
    %v436 = vld [vmem:[#allocation10 + $0xc0] sm:$0xff]
    %v437 = vld [vmem:[#allocation10 + $0xc8] sm:$0xff]
    %v438 = vld [vmem:[#allocation10 + $0xd0] sm:$0xff]
    %v439 = vld [vmem:[#allocation10 + $0xd8] sm:$0xff]
    %v440 = vld [vmem:[#allocation10 + $0xe0] sm:$0xff]
    %v441 = vld [vmem:[#allocation10 + $0xe8] sm:$0xff]
    %v442 = vld [vmem:[#allocation10 + $0xf0] sm:$0xff]
    %v443 = vld [vmem:[#allocation10 + $0xf8] sm:$0xff]
    %v444 = vld [vmem:[#allocation10 + $0x100] sm:$0xff]
    %v445 = vld [vmem:[#allocation10 + $0x108] sm:$0xff]
    %v446 = vld [vmem:[#allocation10 + $0x110] sm:$0xff]
    %v447 = vld [vmem:[#allocation10 + $0x118] sm:$0xff]
    %v448 = vld [vmem:[#allocation10 + $0x120] sm:$0xff]
    %v449 = vld [vmem:[#allocation10 + $0x128] sm:$0xff]
    %v450 = vld [vmem:[#allocation10 + $0x130] sm:$0xff]
    %v451 = vld [vmem:[#allocation10 + $0x138] sm:$0xff]
    %v452 = vld [vmem:[#allocation10 + $0x140] sm:$0xff]
    %v453 = vld [vmem:[#allocation10 + $0x148] sm:$0xff]
    %v454 = vld [vmem:[#allocation10 + $0x150] sm:$0xff]
    %v455 = vld [vmem:[#allocation10 + $0x158] sm:$0xff]
    %v456 = vld [vmem:[#allocation10 + $0x160] sm:$0xff]
    %v457 = vld [vmem:[#allocation10 + $0x168] sm:$0xff]
    %v458 = vld [vmem:[#allocation10 + $0x170] sm:$0xff]
    %v459 = vld [vmem:[#allocation10 + $0x178] sm:$0xff]
    %v460 = vld [vmem:[#allocation10 + $0x180] sm:$0xff]
    %v461 = vld [vmem:[#allocation10 + $0x188] sm:$0xff]
    %v462 = vld [vmem:[#allocation10 + $0x190] sm:$0xff]
    %v463 = vld [vmem:[#allocation10 + $0x198] sm:$0xff]
    %v464 = vld [vmem:[#allocation10 + $0x1a0] sm:$0xff]
    %v465 = vld [vmem:[#allocation10 + $0x1a8] sm:$0xff]
    %v466 = vld [vmem:[#allocation10 + $0x1b0] sm:$0xff]
    %v467 = vld [vmem:[#allocation10 + $0x1b8] sm:$0xff]
    %v468 = vld [vmem:[#allocation10 + $0x1c0] sm:$0xff]
    %v469 = vld [vmem:[#allocation10 + $0x1c8] sm:$0xff]
    %v470 = vld [vmem:[#allocation10 + $0x1d0] sm:$0xff]
    %v471 = vld [vmem:[#allocation10 + $0x1d8] sm:$0xff]
    %v472 = vld [vmem:[#allocation10 + $0x1e0] sm:$0xff]
    %v473 = vld [vmem:[#allocation10 + $0x1e8] sm:$0xff]
    %v474 = vld [vmem:[#allocation10 + $0x1f0] sm:$0xff]
    %v475 = vld [vmem:[#allocation10 + $0x1f8] sm:$0xff]
    %v476 = vld [vmem:[#allocation10 + $0x200] sm:$0xff]
    %v477 = vld [vmem:[#allocation10 + $0x208] sm:$0xff]
    %v478 = vld [vmem:[#allocation10 + $0x210] sm:$0xff]
    %v479 = vld [vmem:[#allocation10 + $0x218] sm:$0xff]
    %v480 = vld [vmem:[#allocation10 + $0x220] sm:$0xff]
    %v481 = vld [vmem:[#allocation10 + $0x228] sm:$0xff]
    %v482 = vld [vmem:[#allocation10 + $0x230] sm:$0xff]
    %v483 = vld [vmem:[#allocation10 + $0x238] sm:$0xff]
    %v484 = vld [vmem:[#allocation10 + $0x240] sm:$0xff]
    %v485 = vld [vmem:[#allocation10 + $0x248] sm:$0xff]
    %v486 = vld [vmem:[#allocation10 + $0x250] sm:$0xff]
    %v487 = vld [vmem:[#allocation10 + $0x258] sm:$0xff]
    %v488 = vld [vmem:[#allocation10 + $0x260] sm:$0xff]
    %v489 = vld [vmem:[#allocation10 + $0x268] sm:$0xff]
    %v490 = vld [vmem:[#allocation10 + $0x270] sm:$0xff]
    %v491 = vld [vmem:[#allocation10 + $0x278] sm:$0xff]
    %v492 = vld [vmem:[#allocation10 + $0x280] sm:$0xff]
    %v493 = vld [vmem:[#allocation10 + $0x288] sm:$0xff]
    %v494 = vld [vmem:[#allocation10 + $0x290] sm:$0xff]
    %v495 = vld [vmem:[#allocation10 + $0x298] sm:$0xff]
    %v496 = vld [vmem:[#allocation10 + $0x2a0] sm:$0xff]
    %v497 = vld [vmem:[#allocation10 + $0x2a8] sm:$0xff]
    %v498 = vld [vmem:[#allocation10 + $0x2b0] sm:$0xff]
    %v499 = vld [vmem:[#allocation10 + $0x2b8] sm:$0xff]
    %v500 = vld [vmem:[#allocation10 + $0x2c0] sm:$0xff]
    %v501 = vld [vmem:[#allocation10 + $0x2c8] sm:$0xff]
    %v502 = vld [vmem:[#allocation10 + $0x2d0] sm:$0xff]
    %v503 = vld [vmem:[#allocation10 + $0x2d8] sm:$0xff]
    %v504 = vld [vmem:[#allocation10 + $0x2e0] sm:$0xff]
    %v505 = vld [vmem:[#allocation10 + $0x2e8] sm:$0xff]
    %v506 = vld [vmem:[#allocation10 + $0x2f0] sm:$0xff]
    %v507 = vld [vmem:[#allocation10 + $0x2f8] sm:$0xff]
    %v508 = vld [vmem:[#allocation10 + $0x300] sm:$0xff]
    %v509 = vld [vmem:[#allocation10 + $0x308] sm:$0xff]
    %v510 = vld [vmem:[#allocation10 + $0x310] sm:$0xff]
    %v511 = vld [vmem:[#allocation10 + $0x318] sm:$0xff]
    %v512 = vld [vmem:[#allocation10 + $0x320] sm:$0xff]
    %v513 = vld [vmem:[#allocation10 + $0x328] sm:$0xff]
    %v514 = vld [vmem:[#allocation10 + $0x330] sm:$0xff]
    %v515 = vld [vmem:[#allocation10 + $0x338] sm:$0xff]
    %v516 = vld [vmem:[#allocation10 + $0x340] sm:$0xff]
    %v517 = vld [vmem:[#allocation10 + $0x348] sm:$0xff]
    %v518 = vld [vmem:[#allocation10 + $0x350] sm:$0xff]
    %v519 = vld [vmem:[#allocation10 + $0x358] sm:$0xff]
    %v520 = vld [vmem:[#allocation10 + $0x360] sm:$0xff]
    %v521 = vld [vmem:[#allocation10 + $0x368] sm:$0xff]
    %v522 = vld [vmem:[#allocation10 + $0x370] sm:$0xff]
    %v523 = vld [vmem:[#allocation10 + $0x378] sm:$0xff]
    %v524 = vld [vmem:[#allocation10 + $0x380] sm:$0xff]
    %v525 = vld [vmem:[#allocation10 + $0x388] sm:$0xff]
    %v526 = vld [vmem:[#allocation10 + $0x390] sm:$0xff]
    %v527 = vld [vmem:[#allocation10 + $0x398] sm:$0xff]
    %v528 = vld [vmem:[#allocation10 + $0x3a0] sm:$0xff]
    %v529 = vld [vmem:[#allocation10 + $0x3a8] sm:$0xff]
    %v530 = vld [vmem:[#allocation10 + $0x3b0] sm:$0xff]
    %v531 = vld [vmem:[#allocation10 + $0x3b8] sm:$0xff]
    %v532 = vld [vmem:[#allocation10 + $0x3c0] sm:$0xff]
    %v533 = vld [vmem:[#allocation10 + $0x3c8] sm:$0xff]
    %v534 = vld [vmem:[#allocation10 + $0x3d0] sm:$0xff]
    %v535 = vld [vmem:[#allocation10 + $0x3d8] sm:$0xff]
    %v536 = vld [vmem:[#allocation10 + $0x3e0] sm:$0xff]
    %v537 = vld [vmem:[#allocation10 + $0x3e8] sm:$0xff]
    %v538 = vld [vmem:[#allocation10 + $0x3f0] sm:$0xff]
    %v539 = vld [vmem:[#allocation10 + $0x3f8] sm:$0xff]
    %v540 = vld [vmem:[%s6] sm:$0xf]
    %v542 = vlaneseq
    %v543 = vshrl.u32 %v542, 7
    %v544 = vsub.s32 0, %v543
    %v545 = vrot.slane %v540, %v544
    %v546 = vlaneseq
    %v547 = vshrl.u32 %v546, 7
    %v548 = vsub.s32 1, %v547
    %v549 = vrot.slane %v540, %v548
    %v550 = vlaneseq
    %v551 = vshrl.u32 %v550, 7
    %v552 = vsub.s32 2, %v551
    %v553 = vrot.slane %v540, %v552
    %v554 = vlaneseq
    %v555 = vshrl.u32 %v554, 7
    %v556 = vsub.s32 3, %v555
    %v557 = vrot.slane %v540, %v556
    %v690 = vunpack.c.l.b16 %v412
    %v691 = vunpack.c.h.b16 %v412
    %v692 = vunpack.c.l.b16 %v413
    %v693 = vunpack.c.h.b16 %v413
    %v694 = vunpack.c.l.b16 %v414
    %v695 = vunpack.c.h.b16 %v414
    %v696 = vunpack.c.l.b16 %v415
    %v697 = vunpack.c.h.b16 %v415
    %v698 = vunpack.c.l.b16 %v416
    %v699 = vunpack.c.h.b16 %v416
    %v700 = vunpack.c.l.b16 %v417
    %v701 = vunpack.c.h.b16 %v417
    %v702 = vunpack.c.l.b16 %v418
    %v703 = vunpack.c.h.b16 %v418
    %v704 = vunpack.c.l.b16 %v419
    %v705 = vunpack.c.h.b16 %v419
    %v706 = vunpack.c.l.b16 %v420
    %v707 = vunpack.c.h.b16 %v420
    %v708 = vunpack.c.l.b16 %v421
    %v709 = vunpack.c.h.b16 %v421
    %v710 = vunpack.c.l.b16 %v422
    %v711 = vunpack.c.h.b16 %v422
    %v712 = vunpack.c.l.b16 %v423
    %v713 = vunpack.c.h.b16 %v423
    %v714 = vunpack.c.l.b16 %v424
    %v715 = vunpack.c.h.b16 %v424
    %v716 = vunpack.c.l.b16 %v425
    %v717 = vunpack.c.h.b16 %v425
    %v718 = vunpack.c.l.b16 %v426
    %v719 = vunpack.c.h.b16 %v426
    %v720 = vunpack.c.l.b16 %v427
    %v721 = vunpack.c.h.b16 %v427
    %v722 = vunpack.c.l.b16 %v428
    %v723 = vunpack.c.h.b16 %v428
    %v724 = vunpack.c.l.b16 %v429
    %v725 = vunpack.c.h.b16 %v429
    %v726 = vunpack.c.l.b16 %v430
    %v727 = vunpack.c.h.b16 %v430
    %v728 = vunpack.c.l.b16 %v431
    %v729 = vunpack.c.h.b16 %v431
    %v730 = vunpack.c.l.b16 %v432
    %v731 = vunpack.c.h.b16 %v432
    %v732 = vunpack.c.l.b16 %v433
    %v733 = vunpack.c.h.b16 %v433
    %v734 = vunpack.c.l.b16 %v434
    %v735 = vunpack.c.h.b16 %v434
    %v736 = vunpack.c.l.b16 %v435
    %v737 = vunpack.c.h.b16 %v435
    %v738 = vunpack.c.l.b16 %v436
    %v739 = vunpack.c.h.b16 %v436
    %v740 = vunpack.c.l.b16 %v437
    %v741 = vunpack.c.h.b16 %v437
    %v742 = vunpack.c.l.b16 %v438
    %v743 = vunpack.c.h.b16 %v438
    %v744 = vunpack.c.l.b16 %v439
    %v745 = vunpack.c.h.b16 %v439
    %v746 = vunpack.c.l.b16 %v440
    %v747 = vunpack.c.h.b16 %v440
    %v748 = vunpack.c.l.b16 %v441
    %v749 = vunpack.c.h.b16 %v441
    %v750 = vunpack.c.l.b16 %v442
    %v751 = vunpack.c.h.b16 %v442
    %v752 = vunpack.c.l.b16 %v443
    %v753 = vunpack.c.h.b16 %v443
    %v754 = vunpack.c.l.b16 %v444
    %v755 = vunpack.c.h.b16 %v444
    %v756 = vunpack.c.l.b16 %v445
    %v757 = vunpack.c.h.b16 %v445
    %v758 = vunpack.c.l.b16 %v446
    %v759 = vunpack.c.h.b16 %v446
    %v760 = vunpack.c.l.b16 %v447
    %v761 = vunpack.c.h.b16 %v447
    %v762 = vunpack.c.l.b16 %v448
    %v763 = vunpack.c.h.b16 %v448
    %v764 = vunpack.c.l.b16 %v449
    %v765 = vunpack.c.h.b16 %v449
    %v766 = vunpack.c.l.b16 %v450
    %v767 = vunpack.c.h.b16 %v450
    %v768 = vunpack.c.l.b16 %v451
    %v769 = vunpack.c.h.b16 %v451
    %v770 = vunpack.c.l.b16 %v452
    %v771 = vunpack.c.h.b16 %v452
    %v772 = vunpack.c.l.b16 %v453
    %v773 = vunpack.c.h.b16 %v453
    %v774 = vunpack.c.l.b16 %v454
    %v775 = vunpack.c.h.b16 %v454
    %v776 = vunpack.c.l.b16 %v455
    %v777 = vunpack.c.h.b16 %v455
    %v778 = vunpack.c.l.b16 %v456
    %v779 = vunpack.c.h.b16 %v456
    %v780 = vunpack.c.l.b16 %v457
    %v781 = vunpack.c.h.b16 %v457
    %v782 = vunpack.c.l.b16 %v458
    %v783 = vunpack.c.h.b16 %v458
    %v784 = vunpack.c.l.b16 %v459
    %v785 = vunpack.c.h.b16 %v459
    %v786 = vunpack.c.l.b16 %v460
    %v787 = vunpack.c.h.b16 %v460
    %v788 = vunpack.c.l.b16 %v461
    %v789 = vunpack.c.h.b16 %v461
    %v790 = vunpack.c.l.b16 %v462
    %v791 = vunpack.c.h.b16 %v462
    %v792 = vunpack.c.l.b16 %v463
    %v793 = vunpack.c.h.b16 %v463
    %v794 = vunpack.c.l.b16 %v464
    %v795 = vunpack.c.h.b16 %v464
    %v796 = vunpack.c.l.b16 %v465
    %v797 = vunpack.c.h.b16 %v465
    %v798 = vunpack.c.l.b16 %v466
    %v799 = vunpack.c.h.b16 %v466
    %v800 = vunpack.c.l.b16 %v467
    %v801 = vunpack.c.h.b16 %v467
    %v802 = vunpack.c.l.b16 %v468
    %v803 = vunpack.c.h.b16 %v468
    %v804 = vunpack.c.l.b16 %v469
    %v805 = vunpack.c.h.b16 %v469
    %v806 = vunpack.c.l.b16 %v470
    %v807 = vunpack.c.h.b16 %v470
    %v808 = vunpack.c.l.b16 %v471
    %v809 = vunpack.c.h.b16 %v471
    %v810 = vunpack.c.l.b16 %v472
    %v811 = vunpack.c.h.b16 %v472
    %v812 = vunpack.c.l.b16 %v473
    %v813 = vunpack.c.h.b16 %v473
    %v814 = vunpack.c.l.b16 %v474
    %v815 = vunpack.c.h.b16 %v474
    %v816 = vunpack.c.l.b16 %v475
    %v817 = vunpack.c.h.b16 %v475
    %v818 = vunpack.c.l.b16 %v476
    %v819 = vunpack.c.h.b16 %v476
    %v820 = vunpack.c.l.b16 %v477
    %v821 = vunpack.c.h.b16 %v477
    %v822 = vunpack.c.l.b16 %v478
    %v823 = vunpack.c.h.b16 %v478
    %v824 = vunpack.c.l.b16 %v479
    %v825 = vunpack.c.h.b16 %v479
    %v826 = vunpack.c.l.b16 %v480
    %v827 = vunpack.c.h.b16 %v480
    %v828 = vunpack.c.l.b16 %v481
    %v829 = vunpack.c.h.b16 %v481
    %v830 = vunpack.c.l.b16 %v482
    %v831 = vunpack.c.h.b16 %v482
    %v832 = vunpack.c.l.b16 %v483
    %v833 = vunpack.c.h.b16 %v483
    %v834 = vunpack.c.l.b16 %v484
    %v835 = vunpack.c.h.b16 %v484
    %v836 = vunpack.c.l.b16 %v485
    %v837 = vunpack.c.h.b16 %v485
    %v838 = vunpack.c.l.b16 %v486
    %v839 = vunpack.c.h.b16 %v486
    %v840 = vunpack.c.l.b16 %v487
    %v841 = vunpack.c.h.b16 %v487
    %v842 = vunpack.c.l.b16 %v488
    %v843 = vunpack.c.h.b16 %v488
    %v844 = vunpack.c.l.b16 %v489
    %v845 = vunpack.c.h.b16 %v489
    %v846 = vunpack.c.l.b16 %v490
    %v847 = vunpack.c.h.b16 %v490
    %v848 = vunpack.c.l.b16 %v491
    %v849 = vunpack.c.h.b16 %v491
    %v850 = vunpack.c.l.b16 %v492
    %v851 = vunpack.c.h.b16 %v492
    %v852 = vunpack.c.l.b16 %v493
    %v853 = vunpack.c.h.b16 %v493
    %v854 = vunpack.c.l.b16 %v494
    %v855 = vunpack.c.h.b16 %v494
    %v856 = vunpack.c.l.b16 %v495
    %v857 = vunpack.c.h.b16 %v495
    %v858 = vunpack.c.l.b16 %v496
    %v859 = vunpack.c.h.b16 %v496
    %v860 = vunpack.c.l.b16 %v497
    %v861 = vunpack.c.h.b16 %v497
    %v862 = vunpack.c.l.b16 %v498
    %v863 = vunpack.c.h.b16 %v498
    %v864 = vunpack.c.l.b16 %v499
    %v865 = vunpack.c.h.b16 %v499
    %v866 = vunpack.c.l.b16 %v500
    %v867 = vunpack.c.h.b16 %v500
    %v868 = vunpack.c.l.b16 %v501
    %v869 = vunpack.c.h.b16 %v501
    %v870 = vunpack.c.l.b16 %v502
    %v871 = vunpack.c.h.b16 %v502
    %v872 = vunpack.c.l.b16 %v503
    %v873 = vunpack.c.h.b16 %v503
    %v874 = vunpack.c.l.b16 %v504
    %v875 = vunpack.c.h.b16 %v504
    %v876 = vunpack.c.l.b16 %v505
    %v877 = vunpack.c.h.b16 %v505
    %v878 = vunpack.c.l.b16 %v506
    %v879 = vunpack.c.h.b16 %v506
    %v880 = vunpack.c.l.b16 %v507
    %v881 = vunpack.c.h.b16 %v507
    %v882 = vunpack.c.l.b16 %v508
    %v883 = vunpack.c.h.b16 %v508
    %v884 = vunpack.c.l.b16 %v509
    %v885 = vunpack.c.h.b16 %v509
    %v886 = vunpack.c.l.b16 %v510
    %v887 = vunpack.c.h.b16 %v510
    %v888 = vunpack.c.l.b16 %v511
    %v889 = vunpack.c.h.b16 %v511
    %v890 = vunpack.c.l.b16 %v512
    %v891 = vunpack.c.h.b16 %v512
    %v892 = vunpack.c.l.b16 %v513
    %v893 = vunpack.c.h.b16 %v513
    %v894 = vunpack.c.l.b16 %v514
    %v895 = vunpack.c.h.b16 %v514
    %v896 = vunpack.c.l.b16 %v515
    %v897 = vunpack.c.h.b16 %v515
    %v898 = vunpack.c.l.b16 %v516
    %v899 = vunpack.c.h.b16 %v516
    %v900 = vunpack.c.l.b16 %v517
    %v901 = vunpack.c.h.b16 %v517
    %v902 = vunpack.c.l.b16 %v518
    %v903 = vunpack.c.h.b16 %v518
    %v904 = vunpack.c.l.b16 %v519
    %v905 = vunpack.c.h.b16 %v519
    %v906 = vunpack.c.l.b16 %v520
    %v907 = vunpack.c.h.b16 %v520
    %v908 = vunpack.c.l.b16 %v521
    %v909 = vunpack.c.h.b16 %v521
    %v910 = vunpack.c.l.b16 %v522
    %v911 = vunpack.c.h.b16 %v522
    %v912 = vunpack.c.l.b16 %v523
    %v913 = vunpack.c.h.b16 %v523
    %v914 = vunpack.c.l.b16 %v524
    %v915 = vunpack.c.h.b16 %v524
    %v916 = vunpack.c.l.b16 %v525
    %v917 = vunpack.c.h.b16 %v525
    %v918 = vunpack.c.l.b16 %v526
    %v919 = vunpack.c.h.b16 %v526
    %v920 = vunpack.c.l.b16 %v527
    %v921 = vunpack.c.h.b16 %v527
    %v922 = vunpack.c.l.b16 %v528
    %v923 = vunpack.c.h.b16 %v528
    %v924 = vunpack.c.l.b16 %v529
    %v925 = vunpack.c.h.b16 %v529
    %v926 = vunpack.c.l.b16 %v530
    %v927 = vunpack.c.h.b16 %v530
    %v928 = vunpack.c.l.b16 %v531
    %v929 = vunpack.c.h.b16 %v531
    %v930 = vunpack.c.l.b16 %v532
    %v931 = vunpack.c.h.b16 %v532
    %v932 = vunpack.c.l.b16 %v533
    %v933 = vunpack.c.h.b16 %v533
    %v934 = vunpack.c.l.b16 %v534
    %v935 = vunpack.c.h.b16 %v534
    %v936 = vunpack.c.l.b16 %v535
    %v937 = vunpack.c.h.b16 %v535
    %v938 = vunpack.c.l.b16 %v536
    %v939 = vunpack.c.h.b16 %v536
    %v940 = vunpack.c.l.b16 %v537
    %v941 = vunpack.c.h.b16 %v537
    %v942 = vunpack.c.l.b16 %v538
    %v943 = vunpack.c.h.b16 %v538
    %v944 = vunpack.c.l.b16 %v539
    %v945 = vunpack.c.h.b16 %v539
    %v946 = vpack.c.b16 %v694, %v690
    %v947 = vpack.c.b16 %v695, %v691
    %v948 = vpack.c.b16 %v696, %v692
    %v949 = vpack.c.b16 %v697, %v693
    %v950 = vpack.c.b16 %v702, %v698
    %v951 = vpack.c.b16 %v703, %v699
    %v952 = vpack.c.b16 %v704, %v700
    %v953 = vpack.c.b16 %v705, %v701
    %v954 = vpack.c.b16 %v710, %v706
    %v955 = vpack.c.b16 %v711, %v707
    %v956 = vpack.c.b16 %v712, %v708
    %v957 = vpack.c.b16 %v713, %v709
    %v958 = vpack.c.b16 %v718, %v714
    %v959 = vpack.c.b16 %v719, %v715
    %v960 = vpack.c.b16 %v720, %v716
    %v961 = vpack.c.b16 %v721, %v717
    %v962 = vpack.c.b16 %v726, %v722
    %v963 = vpack.c.b16 %v727, %v723
    %v964 = vpack.c.b16 %v728, %v724
    %v965 = vpack.c.b16 %v729, %v725
    %v966 = vpack.c.b16 %v734, %v730
    %v967 = vpack.c.b16 %v735, %v731
    %v968 = vpack.c.b16 %v736, %v732
    %v969 = vpack.c.b16 %v737, %v733
    %v970 = vpack.c.b16 %v742, %v738
    %v971 = vpack.c.b16 %v743, %v739
    %v972 = vpack.c.b16 %v744, %v740
    %v973 = vpack.c.b16 %v745, %v741
    %v974 = vpack.c.b16 %v750, %v746
    %v975 = vpack.c.b16 %v751, %v747
    %v976 = vpack.c.b16 %v752, %v748
    %v977 = vpack.c.b16 %v753, %v749
    %v978 = vpack.c.b16 %v758, %v754
    %v979 = vpack.c.b16 %v759, %v755
    %v980 = vpack.c.b16 %v760, %v756
    %v981 = vpack.c.b16 %v761, %v757
    %v982 = vpack.c.b16 %v766, %v762
    %v983 = vpack.c.b16 %v767, %v763
    %v984 = vpack.c.b16 %v768, %v764
    %v985 = vpack.c.b16 %v769, %v765
    %v986 = vpack.c.b16 %v774, %v770
    %v987 = vpack.c.b16 %v775, %v771
    %v988 = vpack.c.b16 %v776, %v772
    %v989 = vpack.c.b16 %v777, %v773
    %v990 = vpack.c.b16 %v782, %v778
    %v991 = vpack.c.b16 %v783, %v779
    %v992 = vpack.c.b16 %v784, %v780
    %v993 = vpack.c.b16 %v785, %v781
    %v994 = vpack.c.b16 %v790, %v786
    %v995 = vpack.c.b16 %v791, %v787
    %v996 = vpack.c.b16 %v792, %v788
    %v997 = vpack.c.b16 %v793, %v789
    %v998 = vpack.c.b16 %v798, %v794
    %v999 = vpack.c.b16 %v799, %v795
    %v1000 = vpack.c.b16 %v800, %v796
    %v1001 = vpack.c.b16 %v801, %v797
    %v1002 = vpack.c.b16 %v806, %v802
    %v1003 = vpack.c.b16 %v807, %v803
    %v1004 = vpack.c.b16 %v808, %v804
    %v1005 = vpack.c.b16 %v809, %v805
    %v1006 = vpack.c.b16 %v814, %v810
    %v1007 = vpack.c.b16 %v815, %v811
    %v1008 = vpack.c.b16 %v816, %v812
    %v1009 = vpack.c.b16 %v817, %v813
    %v1010 = vpack.c.b16 %v822, %v818
    %v1011 = vpack.c.b16 %v823, %v819
    %v1012 = vpack.c.b16 %v824, %v820
    %v1013 = vpack.c.b16 %v825, %v821
    %v1014 = vpack.c.b16 %v830, %v826
    %v1015 = vpack.c.b16 %v831, %v827
    %v1016 = vpack.c.b16 %v832, %v828
    %v1017 = vpack.c.b16 %v833, %v829
    %v1018 = vpack.c.b16 %v838, %v834
    %v1019 = vpack.c.b16 %v839, %v835
    %v1020 = vpack.c.b16 %v840, %v836
    %v1021 = vpack.c.b16 %v841, %v837
    %v1022 = vpack.c.b16 %v846, %v842
    %v1023 = vpack.c.b16 %v847, %v843
    %v1024 = vpack.c.b16 %v848, %v844
    %v1025 = vpack.c.b16 %v849, %v845
    %v1026 = vpack.c.b16 %v854, %v850
    %v1027 = vpack.c.b16 %v855, %v851
    %v1028 = vpack.c.b16 %v856, %v852
    %v1029 = vpack.c.b16 %v857, %v853
    %v1030 = vpack.c.b16 %v862, %v858
    %v1031 = vpack.c.b16 %v863, %v859
    %v1032 = vpack.c.b16 %v864, %v860
    %v1033 = vpack.c.b16 %v865, %v861
    %v1034 = vpack.c.b16 %v870, %v866
    %v1035 = vpack.c.b16 %v871, %v867
    %v1036 = vpack.c.b16 %v872, %v868
    %v1037 = vpack.c.b16 %v873, %v869
    %v1038 = vpack.c.b16 %v878, %v874
    %v1039 = vpack.c.b16 %v879, %v875
    %v1040 = vpack.c.b16 %v880, %v876
    %v1041 = vpack.c.b16 %v881, %v877
    %v1042 = vpack.c.b16 %v886, %v882
    %v1043 = vpack.c.b16 %v887, %v883
    %v1044 = vpack.c.b16 %v888, %v884
    %v1045 = vpack.c.b16 %v889, %v885
    %v1046 = vpack.c.b16 %v894, %v890
    %v1047 = vpack.c.b16 %v895, %v891
    %v1048 = vpack.c.b16 %v896, %v892
    %v1049 = vpack.c.b16 %v897, %v893
    %v1050 = vpack.c.b16 %v902, %v898
    %v1051 = vpack.c.b16 %v903, %v899
    %v1052 = vpack.c.b16 %v904, %v900
    %v1053 = vpack.c.b16 %v905, %v901
    %v1054 = vpack.c.b16 %v910, %v906
    %v1055 = vpack.c.b16 %v911, %v907
    %v1056 = vpack.c.b16 %v912, %v908
    %v1057 = vpack.c.b16 %v913, %v909
    %v1058 = vpack.c.b16 %v918, %v914
    %v1059 = vpack.c.b16 %v919, %v915
    %v1060 = vpack.c.b16 %v920, %v916
    %v1061 = vpack.c.b16 %v921, %v917
    %v1062 = vpack.c.b16 %v926, %v922
    %v1063 = vpack.c.b16 %v927, %v923
    %v1064 = vpack.c.b16 %v928, %v924
    %v1065 = vpack.c.b16 %v929, %v925
    %v1066 = vpack.c.b16 %v934, %v930
    %v1067 = vpack.c.b16 %v935, %v931
    %v1068 = vpack.c.b16 %v936, %v932
    %v1069 = vpack.c.b16 %v937, %v933
    %v1070 = vpack.c.b16 %v942, %v938
    %v1071 = vpack.c.b16 %v943, %v939
    %v1072 = vpack.c.b16 %v944, %v940
    %v1073 = vpack.c.b16 %v945, %v941
    %1202 = vmatprep.subr.bf16.mxu0 %v975
    %1203 = vmatpush1.bf16.msra.mxu0 %v974
    %1204 = vmatprep.subr.bf16.mxu0 %v971
    %1205 = vmatpush1.bf16.msra.mxu0 %v970
    %1206 = vmatprep.subr.bf16.mxu0 %v967
    %1207 = vmatpush1.bf16.msra.mxu0 %v966
    %1208 = vmatprep.subr.bf16.mxu0 %v963
    %1209 = vmatpush1.bf16.msra.mxu0 %v962
    %1210 = vmatprep.subr.bf16.mxu0 %v959
    %1211 = vmatpush1.bf16.msra.mxu0 %v958
    %1212 = vmatprep.subr.bf16.mxu0 %v955
    %1213 = vmatpush1.bf16.msra.mxu0 %v954
    %1214 = vmatprep.subr.bf16.mxu0 %v951
    %1215 = vmatpush1.bf16.msra.mxu0 %v950
    %1216 = vmatprep.subr.bf16.mxu0 %v947
    %1217 = vmatpush1.bf16.msra.mxu0 %v946
    %1218 = vmatprep.subr.bf16.mxu0 %v1007
    %1219 = vmatpush2.bf16.msra.mxu0 %v1006
    %1220 = vmatprep.subr.bf16.mxu0 %v1003
    %1221 = vmatpush2.bf16.msra.mxu0 %v1002
    %1222 = vmatprep.subr.bf16.mxu0 %v999
    %1223 = vmatpush2.bf16.msra.mxu0 %v998
    %1224 = vmatprep.subr.bf16.mxu0 %v995
    %1225 = vmatpush2.bf16.msra.mxu0 %v994
    %1226 = vmatprep.subr.bf16.mxu0 %v991
    %1227 = vmatpush2.bf16.msra.mxu0 %v990
    %1228 = vmatprep.subr.bf16.mxu0 %v987
    %1229 = vmatpush2.bf16.msra.mxu0 %v986
    %1230 = vmatprep.subr.bf16.mxu0 %v983
    %1231 = vmatpush2.bf16.msra.mxu0 %v982
    %1232 = vmatprep.subr.bf16.mxu0 %v979
    %1233 = vmatpush2.bf16.msra.mxu0 %v978
    %1234 = vmatprep.mubr.bf16.mxu0 %v409
    %1235 = vmatmul.mubr.bf16.gmra.mxu0 %v408
    %v1236 = vpop.f32.mrf.mxu0
    %v1237 = vadd.f32 %v545, %v1236
    %v1238 = vpop.f32.mrf.mxu0
    %v1239 = vadd.f32 %v549, %v1238
    %v1240 = vpop.f32.mrf.mxu0
    %v1241 = vpop.f32.mrf.mxu0
    %1242 = vdwg.mxu0
    %1243 = vmatprep.subr.bf16.mxu0 %v1039
    %1244 = vmatpush1.bf16.msra.mxu0 %v1038
    %1245 = vmatprep.subr.bf16.mxu0 %v1035
    %1246 = vmatpush1.bf16.msra.mxu0 %v1034
    %1247 = vmatprep.subr.bf16.mxu0 %v1031
    %1248 = vmatpush1.bf16.msra.mxu0 %v1030
    %1249 = vmatprep.subr.bf16.mxu0 %v1027
    %1250 = vmatpush1.bf16.msra.mxu0 %v1026
    %1251 = vmatprep.subr.bf16.mxu0 %v1023
    %1252 = vmatpush1.bf16.msra.mxu0 %v1022
    %1253 = vmatprep.subr.bf16.mxu0 %v1019
    %1254 = vmatpush1.bf16.msra.mxu0 %v1018
    %1255 = vmatprep.subr.bf16.mxu0 %v1015
    %1256 = vmatpush1.bf16.msra.mxu0 %v1014
    %1257 = vmatprep.subr.bf16.mxu0 %v1011
    %1258 = vmatpush1.bf16.msra.mxu0 %v1010
    %1259 = vmatprep.subr.bf16.mxu0 %v1071
    %1260 = vmatpush2.bf16.msra.mxu0 %v1070
    %1261 = vmatprep.subr.bf16.mxu0 %v1067
    %1262 = vmatpush2.bf16.msra.mxu0 %v1066
    %1263 = vmatprep.subr.bf16.mxu0 %v1063
    %1264 = vmatpush2.bf16.msra.mxu0 %v1062
    %1265 = vmatprep.subr.bf16.mxu0 %v1059
    %1266 = vmatpush2.bf16.msra.mxu0 %v1058
    %1267 = vmatprep.subr.bf16.mxu0 %v1055
    %1268 = vmatpush2.bf16.msra.mxu0 %v1054
    %1269 = vmatprep.subr.bf16.mxu0 %v1051
    %1270 = vmatpush2.bf16.msra.mxu0 %v1050
    %1271 = vmatprep.subr.bf16.mxu0 %v1047
    %1272 = vmatpush2.bf16.msra.mxu0 %v1046
    %1273 = vmatprep.subr.bf16.mxu0 %v1043
    %1274 = vmatpush2.bf16.msra.mxu0 %v1042
    %1275 = vmatprep.mubr.bf16.mxu0 %v411
    %1276 = vmatmul.mubr.bf16.gmra.mxu0 %v410
    %v1277 = vpop.f32.mrf.mxu0
    %v1278 = vadd.f32 %v1237, %v1277
    %v1279 = vpop.f32.mrf.mxu0
    %v1280 = vadd.f32 %v1239, %v1279
    %v1281 = vpop.f32.mrf.mxu0
    %v1282 = vpop.f32.mrf.mxu0
    %1283 = vdwg.mxu0
    %1284 = vmatprep.subr.bf16.mxu0 %v977
    %1285 = vmatpush1.bf16.msra.mxu0 %v976
    %1286 = vmatprep.subr.bf16.mxu0 %v973
    %1287 = vmatpush1.bf16.msra.mxu0 %v972
    %1288 = vmatprep.subr.bf16.mxu0 %v969
    %1289 = vmatpush1.bf16.msra.mxu0 %v968
    %1290 = vmatprep.subr.bf16.mxu0 %v965
    %1291 = vmatpush1.bf16.msra.mxu0 %v964
    %1292 = vmatprep.subr.bf16.mxu0 %v961
    %1293 = vmatpush1.bf16.msra.mxu0 %v960
    %1294 = vmatprep.subr.bf16.mxu0 %v957
    %1295 = vmatpush1.bf16.msra.mxu0 %v956
    %1296 = vmatprep.subr.bf16.mxu0 %v953
    %1297 = vmatpush1.bf16.msra.mxu0 %v952
    %1298 = vmatprep.subr.bf16.mxu0 %v949
    %1299 = vmatpush1.bf16.msra.mxu0 %v948
    %1300 = vmatprep.subr.bf16.mxu0 %v1009
    %1301 = vmatpush2.bf16.msra.mxu0 %v1008
    %1302 = vmatprep.subr.bf16.mxu0 %v1005
    %1303 = vmatpush2.bf16.msra.mxu0 %v1004
    %1304 = vmatprep.subr.bf16.mxu0 %v1001
    %1305 = vmatpush2.bf16.msra.mxu0 %v1000
    %1306 = vmatprep.subr.bf16.mxu0 %v997
    %1307 = vmatpush2.bf16.msra.mxu0 %v996
    %1308 = vmatprep.subr.bf16.mxu0 %v993
    %1309 = vmatpush2.bf16.msra.mxu0 %v992
    %1310 = vmatprep.subr.bf16.mxu0 %v989
    %1311 = vmatpush2.bf16.msra.mxu0 %v988
    %1312 = vmatprep.subr.bf16.mxu0 %v985
    %1313 = vmatpush2.bf16.msra.mxu0 %v984
    %1314 = vmatprep.subr.bf16.mxu0 %v981
    %1315 = vmatpush2.bf16.msra.mxu0 %v980
    %1316 = vmatprep.mubr.bf16.mxu0 %v409
    %1317 = vmatmul.mubr.bf16.gmra.mxu0 %v408
    %v1318 = vpop.f32.mrf.mxu0
    %v1319 = vadd.f32 %v553, %v1318
    %v1320 = vpop.f32.mrf.mxu0
    %v1321 = vadd.f32 %v557, %v1320
    %v1322 = vpop.f32.mrf.mxu0
    %v1323 = vpop.f32.mrf.mxu0
    %1324 = vdwg.mxu0
    %1325 = vmatprep.subr.bf16.mxu0 %v1041
    %1326 = vmatpush1.bf16.msra.mxu0 %v1040
    %1327 = vmatprep.subr.bf16.mxu0 %v1037
    %1328 = vmatpush1.bf16.msra.mxu0 %v1036
    %1329 = vmatprep.subr.bf16.mxu0 %v1033
    %1330 = vmatpush1.bf16.msra.mxu0 %v1032
    %1331 = vmatprep.subr.bf16.mxu0 %v1029
    %1332 = vmatpush1.bf16.msra.mxu0 %v1028
    %1333 = vmatprep.subr.bf16.mxu0 %v1025
    %1334 = vmatpush1.bf16.msra.mxu0 %v1024
    %1335 = vmatprep.subr.bf16.mxu0 %v1021
    %1336 = vmatpush1.bf16.msra.mxu0 %v1020
    %1337 = vmatprep.subr.bf16.mxu0 %v1017
    %1338 = vmatpush1.bf16.msra.mxu0 %v1016
    %1339 = vmatprep.subr.bf16.mxu0 %v1013
    %1340 = vmatpush1.bf16.msra.mxu0 %v1012
    %1341 = vmatprep.subr.bf16.mxu0 %v1073
    %1342 = vmatpush2.bf16.msra.mxu0 %v1072
    %1343 = vmatprep.subr.bf16.mxu0 %v1069
    %1344 = vmatpush2.bf16.msra.mxu0 %v1068
    %1345 = vmatprep.subr.bf16.mxu0 %v1065
    %1346 = vmatpush2.bf16.msra.mxu0 %v1064
    %1347 = vmatprep.subr.bf16.mxu0 %v1061
    %1348 = vmatpush2.bf16.msra.mxu0 %v1060
    %1349 = vmatprep.subr.bf16.mxu0 %v1057
    %1350 = vmatpush2.bf16.msra.mxu0 %v1056
    %1351 = vmatprep.subr.bf16.mxu0 %v1053
    %1352 = vmatpush2.bf16.msra.mxu0 %v1052
    %1353 = vmatprep.subr.bf16.mxu0 %v1049
    %1354 = vmatpush2.bf16.msra.mxu0 %v1048
    %1355 = vmatprep.subr.bf16.mxu0 %v1045
    %1356 = vmatpush2.bf16.msra.mxu0 %v1044
    %1357 = vmatprep.mubr.bf16.mxu0 %v411
    %1358 = vmatmul.mubr.bf16.gmra.mxu0 %v410
    %v1359 = vpop.f32.mrf.mxu0
    %v1360 = vadd.f32 %v1319, %v1359
    %v1361 = vpop.f32.mrf.mxu0
    %v1362 = vadd.f32 %v1321, %v1361
    %v1363 = vpop.f32.mrf.mxu0
    %v1364 = vpop.f32.mrf.mxu0
    %1365 = vdwg.mxu0
    %v1366 = vmax.f32 %v1278, 0.0
    %v1367 = vmax.f32 %v1280, 0.0
    %v1368 = vmax.f32 %v1360, 0.0
    %v1369 = vmax.f32 %v1362, 0.0
    %v1370 = vpack.c.bf16 %v1366, %v1366
    %v1371 = vpack.c.bf16 %v1367, %v1367
    %v1372 = vpack.c.bf16 %v1368, %v1368
    %v1373 = vpack.c.bf16 %v1369, %v1369
    %v1374 = vld [vmem:[#allocation12] sm:$0xf]
    %v1375 = vld [vmem:[#allocation12 + $0x4] sm:$0xf]
    %v1376 = vld [vmem:[#allocation12 + $0x8] sm:$0xf]
    %v1377 = vld [vmem:[#allocation12 + $0xc] sm:$0xf]
    %v1378 = vld [vmem:[#allocation12 + $0x10] sm:$0xf]
    %v1379 = vld [vmem:[#allocation12 + $0x14] sm:$0xf]
    %v1380 = vld [vmem:[#allocation12 + $0x18] sm:$0xf]
    %v1381 = vld [vmem:[#allocation12 + $0x1c] sm:$0xf]
    %v1382 = vld [vmem:[#allocation12 + $0x20] sm:$0xf]
    %v1383 = vld [vmem:[#allocation12 + $0x24] sm:$0xf]
    %v1384 = vld [vmem:[#allocation12 + $0x28] sm:$0xf]
    %v1385 = vld [vmem:[#allocation12 + $0x2c] sm:$0xf]
    %v1386 = vld [vmem:[#allocation12 + $0x30] sm:$0xf]
    %v1387 = vld [vmem:[#allocation12 + $0x34] sm:$0xf]
    %v1388 = vld [vmem:[#allocation12 + $0x38] sm:$0xf]
    %v1389 = vld [vmem:[#allocation12 + $0x3c] sm:$0xf]
    %v1390 = vld [vmem:[#allocation12 + $0x40] sm:$0xf]
    %v1391 = vld [vmem:[#allocation12 + $0x44] sm:$0xf]
    %v1392 = vld [vmem:[#allocation12 + $0x48] sm:$0xf]
    %v1393 = vld [vmem:[#allocation12 + $0x4c] sm:$0xf]
    %v1394 = vld [vmem:[#allocation12 + $0x50] sm:$0xf]
    %v1395 = vld [vmem:[#allocation12 + $0x54] sm:$0xf]
    %v1396 = vld [vmem:[#allocation12 + $0x58] sm:$0xf]
    %v1397 = vld [vmem:[#allocation12 + $0x5c] sm:$0xf]
    %v1398 = vld [vmem:[#allocation12 + $0x60] sm:$0xf]
    %v1399 = vld [vmem:[#allocation12 + $0x64] sm:$0xf]
    %v1400 = vld [vmem:[#allocation12 + $0x68] sm:$0xf]
    %v1401 = vld [vmem:[#allocation12 + $0x6c] sm:$0xf]
    %v1402 = vld [vmem:[#allocation12 + $0x70] sm:$0xf]
    %v1403 = vld [vmem:[#allocation12 + $0x74] sm:$0xf]
    %v1404 = vld [vmem:[#allocation12 + $0x78] sm:$0xf]
    %v1405 = vld [vmem:[#allocation12 + $0x7c] sm:$0xf]
    %v1406 = vld [vmem:[#allocation12 + $0x80] sm:$0xf]
    %v1407 = vld [vmem:[#allocation12 + $0x84] sm:$0xf]
    %v1408 = vld [vmem:[#allocation12 + $0x88] sm:$0xf]
    %v1409 = vld [vmem:[#allocation12 + $0x8c] sm:$0xf]
    %v1410 = vld [vmem:[#allocation12 + $0x90] sm:$0xf]
    %v1411 = vld [vmem:[#allocation12 + $0x94] sm:$0xf]
    %v1412 = vld [vmem:[#allocation12 + $0x98] sm:$0xf]
    %v1413 = vld [vmem:[#allocation12 + $0x9c] sm:$0xf]
    %v1414 = vld [vmem:[#allocation12 + $0xa0] sm:$0xf]
    %v1415 = vld [vmem:[#allocation12 + $0xa4] sm:$0xf]
    %v1416 = vld [vmem:[#allocation12 + $0xa8] sm:$0xf]
    %v1417 = vld [vmem:[#allocation12 + $0xac] sm:$0xf]
    %v1418 = vld [vmem:[#allocation12 + $0xb0] sm:$0xf]
    %v1419 = vld [vmem:[#allocation12 + $0xb4] sm:$0xf]
    %v1420 = vld [vmem:[#allocation12 + $0xb8] sm:$0xf]
    %v1421 = vld [vmem:[#allocation12 + $0xbc] sm:$0xf]
    %v1422 = vld [vmem:[#allocation12 + $0xc0] sm:$0xf]
    %v1423 = vld [vmem:[#allocation12 + $0xc4] sm:$0xf]
    %v1424 = vld [vmem:[#allocation12 + $0xc8] sm:$0xf]
    %v1425 = vld [vmem:[#allocation12 + $0xcc] sm:$0xf]
    %v1426 = vld [vmem:[#allocation12 + $0xd0] sm:$0xf]
    %v1427 = vld [vmem:[#allocation12 + $0xd4] sm:$0xf]
    %v1428 = vld [vmem:[#allocation12 + $0xd8] sm:$0xf]
    %v1429 = vld [vmem:[#allocation12 + $0xdc] sm:$0xf]
    %v1430 = vld [vmem:[#allocation12 + $0xe0] sm:$0xf]
    %v1431 = vld [vmem:[#allocation12 + $0xe4] sm:$0xf]
    %v1432 = vld [vmem:[#allocation12 + $0xe8] sm:$0xf]
    %v1433 = vld [vmem:[#allocation12 + $0xec] sm:$0xf]
    %v1434 = vld [vmem:[#allocation12 + $0xf0] sm:$0xf]
    %v1435 = vld [vmem:[#allocation12 + $0xf4] sm:$0xf]
    %v1436 = vld [vmem:[#allocation12 + $0xf8] sm:$0xf]
    %v1437 = vld [vmem:[#allocation12 + $0xfc] sm:$0xf]
    %v1438 = vld [vmem:[%s8] sm:$0x1]
    %v1440 = vlaneseq
    %v1441 = vshrl.u32 %v1440, 7
    %v1442 = vsub.s32 0, %v1441
    %v1443 = vrot.slane %v1438, %v1442
    %v1509 = vunpack.c.l.b16 %v1374
    %v1510 = vunpack.c.l.b16 %v1375
    %v1511 = vunpack.c.l.b16 %v1376
    %v1512 = vunpack.c.l.b16 %v1377
    %v1513 = vunpack.c.l.b16 %v1378
    %v1514 = vunpack.c.l.b16 %v1379
    %v1515 = vunpack.c.l.b16 %v1380
    %v1516 = vunpack.c.l.b16 %v1381
    %v1517 = vunpack.c.l.b16 %v1382
    %v1518 = vunpack.c.l.b16 %v1383
    %v1519 = vunpack.c.l.b16 %v1384
    %v1520 = vunpack.c.l.b16 %v1385
    %v1521 = vunpack.c.l.b16 %v1386
    %v1522 = vunpack.c.l.b16 %v1387
    %v1523 = vunpack.c.l.b16 %v1388
    %v1524 = vunpack.c.l.b16 %v1389
    %v1525 = vunpack.c.l.b16 %v1390
    %v1526 = vunpack.c.l.b16 %v1391
    %v1527 = vunpack.c.l.b16 %v1392
    %v1528 = vunpack.c.l.b16 %v1393
    %v1529 = vunpack.c.l.b16 %v1394
    %v1530 = vunpack.c.l.b16 %v1395
    %v1531 = vunpack.c.l.b16 %v1396
    %v1532 = vunpack.c.l.b16 %v1397
    %v1533 = vunpack.c.l.b16 %v1398
    %v1534 = vunpack.c.l.b16 %v1399
    %v1535 = vunpack.c.l.b16 %v1400
    %v1536 = vunpack.c.l.b16 %v1401
    %v1537 = vunpack.c.l.b16 %v1402
    %v1538 = vunpack.c.l.b16 %v1403
    %v1539 = vunpack.c.l.b16 %v1404
    %v1540 = vunpack.c.l.b16 %v1405
    %v1541 = vunpack.c.l.b16 %v1406
    %v1542 = vunpack.c.l.b16 %v1407
    %v1543 = vunpack.c.l.b16 %v1408
    %v1544 = vunpack.c.l.b16 %v1409
    %v1545 = vunpack.c.l.b16 %v1410
    %v1546 = vunpack.c.l.b16 %v1411
    %v1547 = vunpack.c.l.b16 %v1412
    %v1548 = vunpack.c.l.b16 %v1413
    %v1549 = vunpack.c.l.b16 %v1414
    %v1550 = vunpack.c.l.b16 %v1415
    %v1551 = vunpack.c.l.b16 %v1416
    %v1552 = vunpack.c.l.b16 %v1417
    %v1553 = vunpack.c.l.b16 %v1418
    %v1554 = vunpack.c.l.b16 %v1419
    %v1555 = vunpack.c.l.b16 %v1420
    %v1556 = vunpack.c.l.b16 %v1421
    %v1557 = vunpack.c.l.b16 %v1422
    %v1558 = vunpack.c.l.b16 %v1423
    %v1559 = vunpack.c.l.b16 %v1424
    %v1560 = vunpack.c.l.b16 %v1425
    %v1561 = vunpack.c.l.b16 %v1426
    %v1562 = vunpack.c.l.b16 %v1427
    %v1563 = vunpack.c.l.b16 %v1428
    %v1564 = vunpack.c.l.b16 %v1429
    %v1565 = vunpack.c.l.b16 %v1430
    %v1566 = vunpack.c.l.b16 %v1431
    %v1567 = vunpack.c.l.b16 %v1432
    %v1568 = vunpack.c.l.b16 %v1433
    %v1569 = vunpack.c.l.b16 %v1434
    %v1570 = vunpack.c.l.b16 %v1435
    %v1571 = vunpack.c.l.b16 %v1436
    %v1572 = vunpack.c.l.b16 %v1437
    %v1573 = vpack.c.b16 %v1510, %v1509
    %v1574 = vpack.c.b16 %v1512, %v1511
    %v1575 = vpack.c.b16 %v1514, %v1513
    %v1576 = vpack.c.b16 %v1516, %v1515
    %v1577 = vpack.c.b16 %v1518, %v1517
    %v1578 = vpack.c.b16 %v1520, %v1519
    %v1579 = vpack.c.b16 %v1522, %v1521
    %v1580 = vpack.c.b16 %v1524, %v1523
    %v1581 = vpack.c.b16 %v1526, %v1525
    %v1582 = vpack.c.b16 %v1528, %v1527
    %v1583 = vpack.c.b16 %v1530, %v1529
    %v1584 = vpack.c.b16 %v1532, %v1531
    %v1585 = vpack.c.b16 %v1534, %v1533
    %v1586 = vpack.c.b16 %v1536, %v1535
    %v1587 = vpack.c.b16 %v1538, %v1537
    %v1588 = vpack.c.b16 %v1540, %v1539
    %v1589 = vpack.c.b16 %v1542, %v1541
    %v1590 = vpack.c.b16 %v1544, %v1543
    %v1591 = vpack.c.b16 %v1546, %v1545
    %v1592 = vpack.c.b16 %v1548, %v1547
    %v1593 = vpack.c.b16 %v1550, %v1549
    %v1594 = vpack.c.b16 %v1552, %v1551
    %v1595 = vpack.c.b16 %v1554, %v1553
    %v1596 = vpack.c.b16 %v1556, %v1555
    %v1597 = vpack.c.b16 %v1558, %v1557
    %v1598 = vpack.c.b16 %v1560, %v1559
    %v1599 = vpack.c.b16 %v1562, %v1561
    %v1600 = vpack.c.b16 %v1564, %v1563
    %v1601 = vpack.c.b16 %v1566, %v1565
    %v1602 = vpack.c.b16 %v1568, %v1567
    %v1603 = vpack.c.b16 %v1570, %v1569
    %v1604 = vpack.c.b16 %v1572, %v1571
    %1637 = vmatprep.subr.bf16.mxu0 0
    %1638 = vmatpush1.bf16.msra.mxu0 %v1580
    %1639 = vmatprep.subr.bf16.mxu0 0
    %1640 = vmatpush1.bf16.msra.mxu0 %v1579
    %1641 = vmatprep.subr.bf16.mxu0 0
    %1642 = vmatpush1.bf16.msra.mxu0 %v1578
    %1643 = vmatprep.subr.bf16.mxu0 0
    %1644 = vmatpush1.bf16.msra.mxu0 %v1577
    %1645 = vmatprep.subr.bf16.mxu0 0
    %1646 = vmatpush1.bf16.msra.mxu0 %v1576
    %1647 = vmatprep.subr.bf16.mxu0 0
    %1648 = vmatpush1.bf16.msra.mxu0 %v1575
    %1649 = vmatprep.subr.bf16.mxu0 0
    %1650 = vmatpush1.bf16.msra.mxu0 %v1574
    %1651 = vmatprep.subr.bf16.mxu0 0
    %1652 = vmatpush1.bf16.msra.mxu0 %v1573
    %1653 = vmatprep.subr.bf16.mxu0 0
    %1654 = vmatpush2.bf16.msra.mxu0 %v1588
    %1655 = vmatprep.subr.bf16.mxu0 0
    %1656 = vmatpush2.bf16.msra.mxu0 %v1587
    %1657 = vmatprep.subr.bf16.mxu0 0
    %1658 = vmatpush2.bf16.msra.mxu0 %v1586
    %1659 = vmatprep.subr.bf16.mxu0 0
    %1660 = vmatpush2.bf16.msra.mxu0 %v1585
    %1661 = vmatprep.subr.bf16.mxu0 0
    %1662 = vmatpush2.bf16.msra.mxu0 %v1584
    %1663 = vmatprep.subr.bf16.mxu0 0
    %1664 = vmatpush2.bf16.msra.mxu0 %v1583
    %1665 = vmatprep.subr.bf16.mxu0 0
    %1666 = vmatpush2.bf16.msra.mxu0 %v1582
    %1667 = vmatprep.subr.bf16.mxu0 0
    %1668 = vmatpush2.bf16.msra.mxu0 %v1581
    %1669 = vmatprep.mubr.bf16.mxu0 %v1371
    %1670 = vmatmul.mubr.bf16.gmra.mxu0 %v1370
    %v1671 = vpop.f32.mrf.mxu0
    %v1672 = vadd.f32 %v1443, %v1671
    %v1673 = vpop.f32.mrf.mxu0
    %v1674 = vpop.f32.mrf.mxu0
    %v1675 = vpop.f32.mrf.mxu0
    %1676 = vdwg.mxu0
    %1677 = vmatprep.subr.bf16.mxu0 0
    %1678 = vmatpush1.bf16.msra.mxu0 %v1596
    %1679 = vmatprep.subr.bf16.mxu0 0
    %1680 = vmatpush1.bf16.msra.mxu0 %v1595
    %1681 = vmatprep.subr.bf16.mxu0 0
    %1682 = vmatpush1.bf16.msra.mxu0 %v1594
    %1683 = vmatprep.subr.bf16.mxu0 0
    %1684 = vmatpush1.bf16.msra.mxu0 %v1593
    %1685 = vmatprep.subr.bf16.mxu0 0
    %1686 = vmatpush1.bf16.msra.mxu0 %v1592
    %1687 = vmatprep.subr.bf16.mxu0 0
    %1688 = vmatpush1.bf16.msra.mxu0 %v1591
    %1689 = vmatprep.subr.bf16.mxu0 0
    %1690 = vmatpush1.bf16.msra.mxu0 %v1590
    %1691 = vmatprep.subr.bf16.mxu0 0
    %1692 = vmatpush1.bf16.msra.mxu0 %v1589
    %1693 = vmatprep.subr.bf16.mxu0 0
    %1694 = vmatpush2.bf16.msra.mxu0 %v1604
    %1695 = vmatprep.subr.bf16.mxu0 0
    %1696 = vmatpush2.bf16.msra.mxu0 %v1603
    %1697 = vmatprep.subr.bf16.mxu0 0
    %1698 = vmatpush2.bf16.msra.mxu0 %v1602
    %1699 = vmatprep.subr.bf16.mxu0 0
    %1700 = vmatpush2.bf16.msra.mxu0 %v1601
    %1701 = vmatprep.subr.bf16.mxu0 0
    %1702 = vmatpush2.bf16.msra.mxu0 %v1600
    %1703 = vmatprep.subr.bf16.mxu0 0
    %1704 = vmatpush2.bf16.msra.mxu0 %v1599
    %1705 = vmatprep.subr.bf16.mxu0 0
    %1706 = vmatpush2.bf16.msra.mxu0 %v1598
    %1707 = vmatprep.subr.bf16.mxu0 0
    %1708 = vmatpush2.bf16.msra.mxu0 %v1597
    %1709 = vmatprep.mubr.bf16.mxu0 %v1373
    %1710 = vmatmul.mubr.bf16.gmra.mxu0 %v1372
    %v1711 = vpop.f32.mrf.mxu0
    %v1712 = vadd.f32 %v1672, %v1711
    %v1713 = vpop.f32.mrf.mxu0
    %v1714 = vpop.f32.mrf.mxu0
    %v1715 = vpop.f32.mrf.mxu0
    %1716 = vdwg.mxu0
    %1717 = vst [vmem:[%s9] sm:$0xff] %v1712
    // Predicated region
    $region66: #{critic_forward.1} parent=1 // pred_check
      _
    $region67: #{critic_forward.1} parent=1 // pred_check_branch
      %1719 = sbr.rel (0) target = $region69
    $region68: #{critic_forward.1} parent=1 // pred_region
      _
    $region69: #{critic_forward.1} parent=1 // pred_fallthru
      _
    // Predicated region
    $region70: #{critic_forward.1} parent=1 // pred_check
      _
    $region71: #{critic_forward.1} parent=1 // pred_check_branch
      %1721 = sbr.rel (0) target = $region73
    $region72: #{critic_forward.1} parent=1 // pred_region
      _
    $region73: #{critic_forward.1} parent=1 // pred_fallthru
      _
    %1722 = vsyncpa [#allocation3], 1
    %1723 = vsyncpa [#allocation5], 1
    %1724 = vsyncpa [#allocation8], 1
    %1725 = vsyncpa [#allocation11], 1

</llo_original>
